<compile_context>
chip_gen: v5e
topology: v5e:2x2
jax: 0.10.0
libtpu: 0.0.40
codegen_flags: <defaults>
</compile_context>

<pallas_src>
import numpy as np
import jax
import jax.numpy as jnp
from jax.experimental import pallas as pl
from jax.experimental.pallas import tpu as pltpu

# ------------------------------ hyper-parameters (small) ------------------------------
BATCH          = 2
INPUT_CHANNELS = 32                        # input_channels == channels
CHANNELS       = 32
INPUT_SIZE     = 8                         # input_size (frames at NoiseModel input)
N_NOISE_FRAMES = 16
N_SAMPLES      = 256                       # n_audio_samples
NOISE_STEP     = N_SAMPLES // N_NOISE_FRAMES       # 16 (hop)
NOISE_WINDOW   = NOISE_STEP * 2                    # 32
NOISE_COEFFS   = NOISE_WINDOW // 2 + 1             # 17
P_LANES        = N_NOISE_FRAMES * NOISE_COEFFS     # 272 = params flattened (frame-major, coeff)
SQUARED        = True                      # NoiseModel(..., squared=True, mask_after=1)
MASK_AFTER     = 1
LEAKY_SLOPE    = 0.2
F32            = jnp.float32
BF16           = jnp.bfloat16


# ====================================== kernel ========================================

def noise_model_kernel(x_ref, wup_ref, bup_ref, wfin_ref, bfin_ref, mask_ref,
                       noise_ref, dft_ref, syn_ref, o_ref):
    # ---- ConvUpsample('learned'), both conv layers folded into dense matmuls ----
    # x: (B, C*8) channel-major  ->  h: (B, C*16) channel-major   (bf16 x bf16 -> f32 acc)
    h = jnp.dot(x_ref[...].astype(BF16), wup_ref[...],
                preferred_element_type=jnp.float32) + bup_ref[...]
    h = jnp.where(h >= 0.0, h, LEAKY_SLOPE * h)                     # LeakyReLU(0.2)
    # final Conv1d(C, 17, 3, pad=1); output lanes = frame*17 + coeff (== torch permute(0,2,1))
    p = jnp.dot(h.astype(BF16), wfin_ref[...],
                preferred_element_type=jnp.float32) + bfin_ref[...]

    # ---- NoiseModel activation path: clamp(-1,1) -> (**2 if squared) -> mask_after ----
    p = jnp.clip(p, -1.0, 1.0)
    if SQUARED:
        p = p * p
    if MASK_AFTER is not None:
        # coefficients with coeff-index < mask_after are forced to 1.0 (x[:, :mask_after, :] = 1)
        p = jnp.where(mask_ref[...] > 0.0, 1.0, p)

    # ---- noise_bank2: rfft(hann*frames), filter, irfft+hann+overlap-add, trim ----
    # merged analysis: (B,256) @ (256,544) -> [real | imag] spectrum of the windowed frames
    spec = jnp.dot(noise_ref[...].astype(BF16), dft_ref[...],
                   preferred_element_type=jnp.float32)              # (B, 544)
    # filter both halves by params, then one merged synthesis matmul folds
    # irfft + synthesis window + overlap-add + trim
    filt = spec * jnp.concatenate([p, p], axis=-1)                  # (B, 544)
    audio = jnp.dot(filt.astype(BF16), syn_ref[...],
                    preferred_element_type=jnp.float32)             # (B, 256)
    o_ref[...] = audio                                              # lane-dense store


# ======================= host-side (one-time) parameter folding =======================

def fold_conv_transpose1d(w, b):
    """ConvTranspose1d(C, C, 4, stride=2, padding=1), 8 -> 16, folded to a dense
    (C*8, C*16) matrix acting on channel-major flattened activations."""
    cin, cout, kk = w.shape                 # torch layout (in, out, k)
    wmat = np.zeros((cin * INPUT_SIZE, cout * N_NOISE_FRAMES), np.float32)
    for k in range(kk):
        for ti in range(INPUT_SIZE):
            to = ti * 2 - 1 + k             # t_out = t_in*stride - padding + k
            if 0 <= to < N_NOISE_FRAMES:
                wmat[ti::INPUT_SIZE, to::N_NOISE_FRAMES] += w[:, :, k]
    brow = np.repeat(b, N_NOISE_FRAMES)[None, :].astype(np.float32)    # lane = co*16 + t
    return wmat, brow


def fold_conv1d(w, b):
    """Conv1d(C, 17, 3, padding=1) over length 16, folded to a dense (C*16, 16*17)
    matrix whose output lanes are frame-major (f*17 + coeff)."""
    cout, cin, kk = w.shape                 # torch layout (out, in, k)
    wmat = np.zeros((cin * N_NOISE_FRAMES, N_NOISE_FRAMES * cout), np.float32)
    for k in range(kk):
        for f in range(N_NOISE_FRAMES):
            ti = f + k - 1
            if 0 <= ti < N_NOISE_FRAMES:
                wmat[ti::N_NOISE_FRAMES, f * cout:(f + 1) * cout] += w[:, :, k].T
    brow = np.tile(b, N_NOISE_FRAMES)[None, :].astype(np.float32)      # lane = f*17 + co
    return wmat, brow


def init_params(key):
    k1, k2, k3, k4 = jax.random.split(key, 4)
    c = CHANNELS
    s_up = 1.0 / np.sqrt(c * 4)
    s_fin = 1.0 / np.sqrt(c * 3)
    ct_w = np.asarray(jax.random.uniform(k1, (c, c, 4), F32, -s_up, s_up))            # (in, out, k)
    ct_b = np.asarray(jax.random.uniform(k2, (c,), F32, -s_up, s_up))
    fin_w = np.asarray(jax.random.uniform(k3, (NOISE_COEFFS, c, 3), F32, -s_fin, s_fin))  # (out, in, k)
    fin_b = np.asarray(jax.random.uniform(k4, (NOISE_COEFFS,), F32, -s_fin, s_fin))
    w_up, b_up = fold_conv_transpose1d(ct_w, ct_b)
    w_fin, b_fin = fold_conv1d(fin_w, fin_b)
    # big matrices in bf16 (halves constant DMA, native MXU dtype); biases stay f32
    return {"w_up": jnp.asarray(w_up, BF16), "b_up": jnp.asarray(b_up, F32),
            "w_fin": jnp.asarray(w_fin, BF16), "b_fin": jnp.asarray(b_fin, F32)}


def make_constants():
    n = np.arange(NOISE_WINDOW)
    k = np.arange(NOISE_COEFFS)
    ang = 2.0 * np.pi * np.outer(n, k) / NOISE_WINDOW               # (32, 17)
    hann = 0.5 * (1.0 - np.cos(2.0 * np.pi * n / NOISE_WINDOW))     # torch.hann_window (periodic)
    scale = 1.0 / np.sqrt(NOISE_WINDOW)                             # norm='ortho'
    # analysis (hann analysis window folded in): rfft real / imag
    a_re = hann[:, None] * np.cos(ang) * scale
    a_im = hann[:, None] * (-np.sin(ang)) * scale
    # synthesis: half-spectrum irfft weights + hann synthesis window (overlap_add(apply_window=True))
    wk = np.full(NOISE_COEFFS, 2.0)
    wk[0] = 1.0
    wk[-1] = 1.0
    s_re = hann[:, None] * np.cos(ang) * wk[None, :] * scale
    s_im = hann[:, None] * (-np.sin(ang)) * wk[None, :] * scale

    dft_r = np.zeros((N_SAMPLES, P_LANES), np.float32)
    dft_i = np.zeros((N_SAMPLES, P_LANES), np.float32)
    syn_r = np.zeros((P_LANES, N_SAMPLES), np.float32)
    syn_i = np.zeros((P_LANES, N_SAMPLES), np.float32)
    for f in range(N_NOISE_FRAMES):
        cols = slice(f * NOISE_COEFFS, (f + 1) * NOISE_COEFFS)
        for nn in range(NOISE_WINDOW):
            m = NOISE_STEP * f + nn
            if m < N_SAMPLES:   # analysis: samples >= 256 are the zero pad; synthesis: output trim
                dft_r[m, cols] = a_re[nn]
                dft_i[m, cols] = a_im[nn]
                syn_r[cols, m] = s_re[nn]
                syn_i[cols, m] = s_im[nn]

    # merged spectral operators: analysis (256, 544) = [real | imag] along lanes,
    # synthesis (544, 256) = [real ; imag] along rows  ->  2 matmuls instead of 4
    dft = np.concatenate([dft_r, dft_i], axis=1)
    syn = np.concatenate([syn_r, syn_i], axis=0)

    if MASK_AFTER is None:
        mask = np.zeros((1, P_LANES), np.float32)
    else:
        mask = ((np.arange(P_LANES) % NOISE_COEFFS) < MASK_AFTER).astype(np.float32)[None, :]
    return {"mask": jnp.asarray(mask, F32),
            "dft": jnp.asarray(dft, BF16), "syn": jnp.asarray(syn, BF16)}


# ===================================== forward pass ====================================

def noise_model_forward(x, params, consts, noise_key):
    b = x.shape[0]
    # torch: x = x.view(batch, input_channels, input_size); flatten channel-major for the kernel
    x_flat = x.reshape(b, INPUT_CHANNELS * INPUT_SIZE).astype(F32)
    # torch: FloatTensor(batch, total_samples).uniform_(-1, 1)  ->  jax.random
    noise = jax.random.uniform(noise_key, (b, N_SAMPLES), F32, -1.0, 1.0)

    vmem_spec = pl.BlockSpec(memory_space=pltpu.MemorySpace.VMEM)
    audio = pl.pallas_call(
        noise_model_kernel,
        out_shape=jax.ShapeDtypeStruct((b, N_SAMPLES), F32),
        in_specs=[vmem_spec] * 9,
        out_specs=vmem_spec,
    )(x_flat, params["w_up"], params["b_up"], params["w_fin"], params["b_fin"],
      consts["mask"], noise, consts["dft"], consts["syn"])
    return audio.reshape(b, 1, N_SAMPLES)                            # audio.view(batch, 1, -1)


# ========================================= main ========================================

if __name__ == "__main__":
    key = jax.random.PRNGKey(0)
    kx, kp, kn = jax.random.split(key, 3)
    x = jax.random.normal(kx, (BATCH, INPUT_CHANNELS, INPUT_SIZE), F32)
    params = init_params(kp)
    consts = make_constants()

    fwd = jax.jit(noise_model_forward)
    audio = jax.block_until_ready(fwd(x, params, consts, kn))

    assert audio.shape == (BATCH, 1, N_SAMPLES), audio.shape
    assert bool(jnp.all(jnp.isfinite(audio)))
    print("KERNEL_OK")
</pallas_src>

<mosaic_0001>
module attributes {stable_mosaic.version = 11 : i64} {
  func.func @noise_model_kernel(%arg0: memref<2x256xf32, #tpu.memory_space<vmem>>, %arg1: memref<256x512xbf16, #tpu.memory_space<vmem>>, %arg2: memref<1x512xf32, #tpu.memory_space<vmem>>, %arg3: memref<512x272xbf16, #tpu.memory_space<vmem>>, %arg4: memref<1x272xf32, #tpu.memory_space<vmem>>, %arg5: memref<1x272xf32, #tpu.memory_space<vmem>>, %arg6: memref<2x256xf32, #tpu.memory_space<vmem>>, %arg7: memref<256x544xbf16, #tpu.memory_space<vmem>>, %arg8: memref<544x256xbf16, #tpu.memory_space<vmem>>, %arg9: memref<2x256xf32, #tpu.memory_space<vmem>>) attributes {dimension_semantics = [], scalar_prefetch = 0 : i64, scratch_operands = 0 : i64, tpu.core_type = #tpu.core_type<tc>} {
    %c0 = arith.constant 0 : index
    %c0_0 = arith.constant 0 : index
    %0 = vector.load %arg0[%c0, %c0_0] : memref<2x256xf32, #tpu.memory_space<vmem>>, vector<2x256xf32>
    %1 = arith.truncf %0 : vector<2x256xf32> to vector<2x256xbf16>
    %c0_1 = arith.constant 0 : index
    %c0_2 = arith.constant 0 : index
    %2 = vector.load %arg1[%c0_1, %c0_2] : memref<256x512xbf16, #tpu.memory_space<vmem>>, vector<256x512xbf16>
    %cst = arith.constant dense<0.000000e+00> : vector<2x512xf32>
    %3 = tpu.matmul %1, %2, %cst {dimension_numbers = #tpu.dot_dimension_numbers<[1], [0], [0], [1], [0, 0, 1, 1], [], []>} : vector<2x256xbf16>, vector<256x512xbf16>, vector<2x512xf32> -> vector<2x512xf32>
    %c0_3 = arith.constant 0 : index
    %c0_4 = arith.constant 0 : index
    %4 = vector.load %arg2[%c0_3, %c0_4] : memref<1x512xf32, #tpu.memory_space<vmem>>, vector<1x512xf32>
    %5 = vector.broadcast %4 : vector<1x512xf32> to vector<2x512xf32>
    %6 = arith.addf %3, %5 : vector<2x512xf32>
    %cst_5 = arith.constant 0.000000e+00 : f32
    %7 = vector.broadcast %cst_5 : f32 to vector<2x512xf32>
    %8 = arith.cmpf oge, %6, %7 : vector<2x512xf32>
    %cst_6 = arith.constant 2.000000e-01 : f32
    %9 = vector.broadcast %cst_6 : f32 to vector<2x512xf32>
    %10 = arith.mulf %9, %6 : vector<2x512xf32>
    %11 = arith.select %8, %6, %10 : vector<2x512xi1>, vector<2x512xf32>
    %12 = arith.truncf %11 : vector<2x512xf32> to vector<2x512xbf16>
    %c0_7 = arith.constant 0 : index
    %c0_8 = arith.constant 0 : index
    %13 = vector.load %arg3[%c0_7, %c0_8] : memref<512x272xbf16, #tpu.memory_space<vmem>>, vector<512x272xbf16>
    %cst_9 = arith.constant dense<0.000000e+00> : vector<2x272xf32>
    %14 = tpu.matmul %12, %13, %cst_9 {dimension_numbers = #tpu.dot_dimension_numbers<[1], [0], [0], [1], [0, 0, 1, 1], [], []>} : vector<2x512xbf16>, vector<512x272xbf16>, vector<2x272xf32> -> vector<2x272xf32>
    %c0_10 = arith.constant 0 : index
    %c0_11 = arith.constant 0 : index
    %15 = vector.load %arg4[%c0_10, %c0_11] : memref<1x272xf32, #tpu.memory_space<vmem>>, vector<1x272xf32>
    %16 = vector.broadcast %15 : vector<1x272xf32> to vector<2x272xf32>
    %17 = arith.addf %14, %16 : vector<2x272xf32>
    %cst_12 = arith.constant -1.000000e+00 : f32
    %cst_13 = arith.constant 1.000000e+00 : f32
    %18 = vector.broadcast %cst_12 : f32 to vector<2x272xf32>
    %19 = arith.maximumf %18, %17 : vector<2x272xf32>
    %20 = vector.broadcast %cst_13 : f32 to vector<2x272xf32>
    %21 = arith.minimumf %20, %19 : vector<2x272xf32>
    %22 = arith.mulf %21, %21 : vector<2x272xf32>
    %c0_14 = arith.constant 0 : index
    %c0_15 = arith.constant 0 : index
    %23 = vector.load %arg5[%c0_14, %c0_15] : memref<1x272xf32, #tpu.memory_space<vmem>>, vector<1x272xf32>
    %cst_16 = arith.constant 0.000000e+00 : f32
    %24 = vector.broadcast %cst_16 : f32 to vector<1x272xf32>
    %25 = arith.cmpf ogt, %23, %24 : vector<1x272xf32>
    %cst_17 = arith.constant 1.000000e+00 : f32
    %26 = vector.shape_cast %25 : vector<1x272xi1> to vector<1x272xi1>
    %27 = vector.broadcast %26 : vector<1x272xi1> to vector<2x272xi1>
    %28 = vector.broadcast %cst_17 : f32 to vector<2x272xf32>
    %29 = arith.select %27, %28, %22 : vector<2x272xi1>, vector<2x272xf32>
    %c0_18 = arith.constant 0 : index
    %c0_19 = arith.constant 0 : index
    %30 = vector.load %arg6[%c0_18, %c0_19] : memref<2x256xf32, #tpu.memory_space<vmem>>, vector<2x256xf32>
    %31 = arith.truncf %30 : vector<2x256xf32> to vector<2x256xbf16>
    %c0_20 = arith.constant 0 : index
    %c0_21 = arith.constant 0 : index
    %32 = vector.load %arg7[%c0_20, %c0_21] : memref<256x544xbf16, #tpu.memory_space<vmem>>, vector<256x544xbf16>
    %cst_22 = arith.constant dense<0.000000e+00> : vector<2x544xf32>
    %33 = tpu.matmul %31, %32, %cst_22 {dimension_numbers = #tpu.dot_dimension_numbers<[1], [0], [0], [1], [0, 0, 1, 1], [], []>} : vector<2x256xbf16>, vector<256x544xbf16>, vector<2x544xf32> -> vector<2x544xf32>
    %34 = tpu.concatenate %29, %29 in 1 : vector<2x272xf32>, vector<2x272xf32> -> vector<2x544xf32>
    %35 = arith.mulf %33, %34 : vector<2x544xf32>
    %36 = arith.truncf %35 : vector<2x544xf32> to vector<2x544xbf16>
    %c0_23 = arith.constant 0 : index
    %c0_24 = arith.constant 0 : index
    %37 = vector.load %arg8[%c0_23, %c0_24] : memref<544x256xbf16, #tpu.memory_space<vmem>>, vector<544x256xbf16>
    %cst_25 = arith.constant dense<0.000000e+00> : vector<2x256xf32>
    %38 = tpu.matmul %36, %37, %cst_25 {dimension_numbers = #tpu.dot_dimension_numbers<[1], [0], [0], [1], [0, 0, 1, 1], [], []>} : vector<2x544xbf16>, vector<544x256xbf16>, vector<2x256xf32> -> vector<2x256xf32>
    %c0_26 = arith.constant 0 : index
    %c0_27 = arith.constant 0 : index
    %39 = vector.load %arg9[%c0_26, %c0_27] : memref<2x256xf32, #tpu.memory_space<vmem>>, vector<2x256xf32>
    tpu.vector_store %arg9[%c0_26, %c0_27], %38 {strides = array<i32>} : memref<2x256xf32, #tpu.memory_space<vmem>>, vector<2x256xf32>,
    return
  }
}

</mosaic_0001>

<llo_original>
// kernel: noise_model_forward.1
$region0: #{noise_model_forward.1}
  #allocation0 [shape = 'u32[]', space=smem, size = 0x4, offset = 0x4, fixed_abs, tag = 'smem constant byte address 0x4 - core index']
  #allocation1 [shape = 'u32[72,128]{1,0:T(1,128)}', space=vmem, size = 0x9000, scoped, tag = 'internal scratch']
  %s0 = inlined_call_operand.vmem [shape: f32[2,256], index: 0, kind: input, shape index: {}]
  %s1 = inlined_call_operand.vmem [shape: bf16[256,512], index: 1, kind: input, shape index: {}]
  %s2 = inlined_call_operand.vmem [shape: f32[1,512], index: 2, kind: input, shape index: {}]
  %s3 = inlined_call_operand.vmem [shape: bf16[512,272], index: 3, kind: input, shape index: {}]
  %s4 = inlined_call_operand.vmem [shape: f32[1,272], index: 4, kind: input, shape index: {}]
  %s5 = inlined_call_operand.vmem [shape: f32[1,272], index: 5, kind: input, shape index: {}]
  %s6 = inlined_call_operand.vmem [shape: f32[2,256], index: 6, kind: input, shape index: {}]
  %s7 = inlined_call_operand.vmem [shape: bf16[256,544], index: 7, kind: input, shape index: {}]
  %s8 = inlined_call_operand.vmem [shape: bf16[544,256], index: 8, kind: input, shape index: {}]
  %s9 = inlined_call_operand.vmem [shape: f32[2,256], index: 9, kind: output, shape index: {}]
  %s10 = sld [smem:[#allocation0]]
  $region46: #{noise_model_forward.1} parent=0
    _
  %s12 = ssub.s32 1, %s10
  %s13 = scalar_select 0, %s12, %s10
  // Predicated region
  $region2: #{noise_model_forward.1} parent=0 // pred_check
    _
  $region3: #{noise_model_forward.1} parent=0 // pred_check_branch
    %15 = sbr.rel (0) target = $region5
  $region4: #{noise_model_forward.1} parent=0 // pred_region
    _
  $region5: #{noise_model_forward.1} parent=0 // pred_fallthru
    _
  // Predicated region
  $region6: #{noise_model_forward.1} parent=0 // pred_check
    _
  $region7: #{noise_model_forward.1} parent=0 // pred_check_branch
    %17 = sbr.rel (0) target = $region9
  $region8: #{noise_model_forward.1} parent=0 // pred_region
    _
  $region9: #{noise_model_forward.1} parent=0 // pred_fallthru
    _
  // Predicated region
  $region10: #{noise_model_forward.1} parent=0 // pred_check
    _
  $region11: #{noise_model_forward.1} parent=0 // pred_check_branch
    %19 = sbr.rel (0) target = $region13
  $region12: #{noise_model_forward.1} parent=0 // pred_region
    _
  $region13: #{noise_model_forward.1} parent=0 // pred_fallthru
    _
  // Predicated region
  $region14: #{noise_model_forward.1} parent=0 // pred_check
    _
  $region15: #{noise_model_forward.1} parent=0 // pred_check_branch
    %21 = sbr.rel (0) target = $region17
  $region16: #{noise_model_forward.1} parent=0 // pred_region
    _
  $region17: #{noise_model_forward.1} parent=0 // pred_fallthru
    _
  // Predicated region
  $region18: #{noise_model_forward.1} parent=0 // pred_check
    _
  $region19: #{noise_model_forward.1} parent=0 // pred_check_branch
    %23 = sbr.rel (0) target = $region21
  $region20: #{noise_model_forward.1} parent=0 // pred_region
    _
  $region21: #{noise_model_forward.1} parent=0 // pred_fallthru
    _
  // Predicated region
  $region22: #{noise_model_forward.1} parent=0 // pred_check
    _
  $region23: #{noise_model_forward.1} parent=0 // pred_check_branch
    %25 = sbr.rel (0) target = $region25
  $region24: #{noise_model_forward.1} parent=0 // pred_region
    _
  $region25: #{noise_model_forward.1} parent=0 // pred_fallthru
    _
  // Predicated region
  $region26: #{noise_model_forward.1} parent=0 // pred_check
    _
  $region27: #{noise_model_forward.1} parent=0 // pred_check_branch
    %27 = sbr.rel (0) target = $region29
  $region28: #{noise_model_forward.1} parent=0 // pred_region
    _
  $region29: #{noise_model_forward.1} parent=0 // pred_fallthru
    _
  // Predicated region
  $region30: #{noise_model_forward.1} parent=0 // pred_check
    _
  $region31: #{noise_model_forward.1} parent=0 // pred_check_branch
    %29 = sbr.rel (0) target = $region33
  $region32: #{noise_model_forward.1} parent=0 // pred_region
    _
  $region33: #{noise_model_forward.1} parent=0 // pred_fallthru
    _
  // Predicated region
  $region34: #{noise_model_forward.1} parent=0 // pred_check
    _
  $region35: #{noise_model_forward.1} parent=0 // pred_check_branch
    %31 = sbr.rel (0) target = $region37
  $region36: #{noise_model_forward.1} parent=0 // pred_region
    _
  $region37: #{noise_model_forward.1} parent=0 // pred_fallthru
    _
  %v33 = vld [vmem:[%s0] sm:$0xf]
  %35 = vst [vmem:[#allocation1] ss:$4 sm:$0xff] %v33
  %v36 = vld.sshfl [vmem:[#allocation1] sm:$0xff pattern:$0x73625140]
  %v37 = vld.sshfl [vmem:[#allocation1 + $0x8] sm:$0xff pattern:$0x73625140]
  %v40 = vpack.c.bf16 %v36, %v36
  %v41 = vpack.c.bf16 %v37, %v37
  %v42 = vld [vmem:[%s1] sm:$0xff]
  %v43 = vld [vmem:[%s1 + $0x8] sm:$0xff]
  %v44 = vld [vmem:[%s1 + $0x10] sm:$0xff]
  %v45 = vld [vmem:[%s1 + $0x18] sm:$0xff]
  %v46 = vld [vmem:[%s1 + $0x20] sm:$0xff]
  %v47 = vld [vmem:[%s1 + $0x28] sm:$0xff]
  %v48 = vld [vmem:[%s1 + $0x30] sm:$0xff]
  %v49 = vld [vmem:[%s1 + $0x38] sm:$0xff]
  %v50 = vld [vmem:[%s1 + $0x40] sm:$0xff]
  %v51 = vld [vmem:[%s1 + $0x48] sm:$0xff]
  %v52 = vld [vmem:[%s1 + $0x50] sm:$0xff]
  %v53 = vld [vmem:[%s1 + $0x58] sm:$0xff]
  %v54 = vld [vmem:[%s1 + $0x60] sm:$0xff]
  %v55 = vld [vmem:[%s1 + $0x68] sm:$0xff]
  %v56 = vld [vmem:[%s1 + $0x70] sm:$0xff]
  %v57 = vld [vmem:[%s1 + $0x78] sm:$0xff]
  %v58 = vld [vmem:[%s1 + $0x80] sm:$0xff]
  %v59 = vld [vmem:[%s1 + $0x88] sm:$0xff]
  %v60 = vld [vmem:[%s1 + $0x90] sm:$0xff]
  %v61 = vld [vmem:[%s1 + $0x98] sm:$0xff]
  %v62 = vld [vmem:[%s1 + $0xa0] sm:$0xff]
  %v63 = vld [vmem:[%s1 + $0xa8] sm:$0xff]
  %v64 = vld [vmem:[%s1 + $0xb0] sm:$0xff]
  %v65 = vld [vmem:[%s1 + $0xb8] sm:$0xff]
  %v66 = vld [vmem:[%s1 + $0xc0] sm:$0xff]
  %v67 = vld [vmem:[%s1 + $0xc8] sm:$0xff]
  %v68 = vld [vmem:[%s1 + $0xd0] sm:$0xff]
  %v69 = vld [vmem:[%s1 + $0xd8] sm:$0xff]
  %v70 = vld [vmem:[%s1 + $0xe0] sm:$0xff]
  %v71 = vld [vmem:[%s1 + $0xe8] sm:$0xff]
  %v72 = vld [vmem:[%s1 + $0xf0] sm:$0xff]
  %v73 = vld [vmem:[%s1 + $0xf8] sm:$0xff]
  %v74 = vld [vmem:[%s1 + $0x100] sm:$0xff]
  %v75 = vld [vmem:[%s1 + $0x108] sm:$0xff]
  %v76 = vld [vmem:[%s1 + $0x110] sm:$0xff]
  %v77 = vld [vmem:[%s1 + $0x118] sm:$0xff]
  %v78 = vld [vmem:[%s1 + $0x120] sm:$0xff]
  %v79 = vld [vmem:[%s1 + $0x128] sm:$0xff]
  %v80 = vld [vmem:[%s1 + $0x130] sm:$0xff]
  %v81 = vld [vmem:[%s1 + $0x138] sm:$0xff]
  %v82 = vld [vmem:[%s1 + $0x140] sm:$0xff]
  %v83 = vld [vmem:[%s1 + $0x148] sm:$0xff]
  %v84 = vld [vmem:[%s1 + $0x150] sm:$0xff]
  %v85 = vld [vmem:[%s1 + $0x158] sm:$0xff]
  %v86 = vld [vmem:[%s1 + $0x160] sm:$0xff]
  %v87 = vld [vmem:[%s1 + $0x168] sm:$0xff]
  %v88 = vld [vmem:[%s1 + $0x170] sm:$0xff]
  %v89 = vld [vmem:[%s1 + $0x178] sm:$0xff]
  %v90 = vld [vmem:[%s1 + $0x180] sm:$0xff]
  %v91 = vld [vmem:[%s1 + $0x188] sm:$0xff]
  %v92 = vld [vmem:[%s1 + $0x190] sm:$0xff]
  %v93 = vld [vmem:[%s1 + $0x198] sm:$0xff]
  %v94 = vld [vmem:[%s1 + $0x1a0] sm:$0xff]
  %v95 = vld [vmem:[%s1 + $0x1a8] sm:$0xff]
  %v96 = vld [vmem:[%s1 + $0x1b0] sm:$0xff]
  %v97 = vld [vmem:[%s1 + $0x1b8] sm:$0xff]
  %v98 = vld [vmem:[%s1 + $0x1c0] sm:$0xff]
  %v99 = vld [vmem:[%s1 + $0x1c8] sm:$0xff]
  %v100 = vld [vmem:[%s1 + $0x1d0] sm:$0xff]
  %v101 = vld [vmem:[%s1 + $0x1d8] sm:$0xff]
  %v102 = vld [vmem:[%s1 + $0x1e0] sm:$0xff]
  %v103 = vld [vmem:[%s1 + $0x1e8] sm:$0xff]
  %v104 = vld [vmem:[%s1 + $0x1f0] sm:$0xff]
  %v105 = vld [vmem:[%s1 + $0x1f8] sm:$0xff]
  %v106 = vld [vmem:[%s2] sm:$0xf]
  %v108 = vperm.slane %v106, 0
  %v109 = vperm.slane %v106, 1
  %v110 = vperm.slane %v106, 2
  %v111 = vperm.slane %v106, 3
  %v180 = vunpack.c.l.b16 %v42
  %v181 = vunpack.c.h.b16 %v42
  %v182 = vunpack.c.l.b16 %v43
  %v183 = vunpack.c.h.b16 %v43
  %v184 = vunpack.c.l.b16 %v44
  %v185 = vunpack.c.h.b16 %v44
  %v186 = vunpack.c.l.b16 %v45
  %v187 = vunpack.c.h.b16 %v45
  %v188 = vunpack.c.l.b16 %v46
  %v189 = vunpack.c.h.b16 %v46
  %v190 = vunpack.c.l.b16 %v47
  %v191 = vunpack.c.h.b16 %v47
  %v192 = vunpack.c.l.b16 %v48
  %v193 = vunpack.c.h.b16 %v48
  %v194 = vunpack.c.l.b16 %v49
  %v195 = vunpack.c.h.b16 %v49
  %v196 = vunpack.c.l.b16 %v50
  %v197 = vunpack.c.h.b16 %v50
  %v198 = vunpack.c.l.b16 %v51
  %v199 = vunpack.c.h.b16 %v51
  %v200 = vunpack.c.l.b16 %v52
  %v201 = vunpack.c.h.b16 %v52
  %v202 = vunpack.c.l.b16 %v53
  %v203 = vunpack.c.h.b16 %v53
  %v204 = vunpack.c.l.b16 %v54
  %v205 = vunpack.c.h.b16 %v54
  %v206 = vunpack.c.l.b16 %v55
  %v207 = vunpack.c.h.b16 %v55
  %v208 = vunpack.c.l.b16 %v56
  %v209 = vunpack.c.h.b16 %v56
  %v210 = vunpack.c.l.b16 %v57
  %v211 = vunpack.c.h.b16 %v57
  %v212 = vunpack.c.l.b16 %v58
  %v213 = vunpack.c.h.b16 %v58
  %v214 = vunpack.c.l.b16 %v59
  %v215 = vunpack.c.h.b16 %v59
  %v216 = vunpack.c.l.b16 %v60
  %v217 = vunpack.c.h.b16 %v60
  %v218 = vunpack.c.l.b16 %v61
  %v219 = vunpack.c.h.b16 %v61
  %v220 = vunpack.c.l.b16 %v62
  %v221 = vunpack.c.h.b16 %v62
  %v222 = vunpack.c.l.b16 %v63
  %v223 = vunpack.c.h.b16 %v63
  %v224 = vunpack.c.l.b16 %v64
  %v225 = vunpack.c.h.b16 %v64
  %v226 = vunpack.c.l.b16 %v65
  %v227 = vunpack.c.h.b16 %v65
  %v228 = vunpack.c.l.b16 %v66
  %v229 = vunpack.c.h.b16 %v66
  %v230 = vunpack.c.l.b16 %v67
  %v231 = vunpack.c.h.b16 %v67
  %v232 = vunpack.c.l.b16 %v68
  %v233 = vunpack.c.h.b16 %v68
  %v234 = vunpack.c.l.b16 %v69
  %v235 = vunpack.c.h.b16 %v69
  %v236 = vunpack.c.l.b16 %v70
  %v237 = vunpack.c.h.b16 %v70
  %v238 = vunpack.c.l.b16 %v71
  %v239 = vunpack.c.h.b16 %v71
  %v240 = vunpack.c.l.b16 %v72
  %v241 = vunpack.c.h.b16 %v72
  %v242 = vunpack.c.l.b16 %v73
  %v243 = vunpack.c.h.b16 %v73
  %v244 = vunpack.c.l.b16 %v74
  %v245 = vunpack.c.h.b16 %v74
  %v246 = vunpack.c.l.b16 %v75
  %v247 = vunpack.c.h.b16 %v75
  %v248 = vunpack.c.l.b16 %v76
  %v249 = vunpack.c.h.b16 %v76
  %v250 = vunpack.c.l.b16 %v77
  %v251 = vunpack.c.h.b16 %v77
  %v252 = vunpack.c.l.b16 %v78
  %v253 = vunpack.c.h.b16 %v78
  %v254 = vunpack.c.l.b16 %v79
  %v255 = vunpack.c.h.b16 %v79
  %v256 = vunpack.c.l.b16 %v80
  %v257 = vunpack.c.h.b16 %v80
  %v258 = vunpack.c.l.b16 %v81
  %v259 = vunpack.c.h.b16 %v81
  %v260 = vunpack.c.l.b16 %v82
  %v261 = vunpack.c.h.b16 %v82
  %v262 = vunpack.c.l.b16 %v83
  %v263 = vunpack.c.h.b16 %v83
  %v264 = vunpack.c.l.b16 %v84
  %v265 = vunpack.c.h.b16 %v84
  %v266 = vunpack.c.l.b16 %v85
  %v267 = vunpack.c.h.b16 %v85
  %v268 = vunpack.c.l.b16 %v86
  %v269 = vunpack.c.h.b16 %v86
  %v270 = vunpack.c.l.b16 %v87
  %v271 = vunpack.c.h.b16 %v87
  %v272 = vunpack.c.l.b16 %v88
  %v273 = vunpack.c.h.b16 %v88
  %v274 = vunpack.c.l.b16 %v89
  %v275 = vunpack.c.h.b16 %v89
  %v276 = vunpack.c.l.b16 %v90
  %v277 = vunpack.c.h.b16 %v90
  %v278 = vunpack.c.l.b16 %v91
  %v279 = vunpack.c.h.b16 %v91
  %v280 = vunpack.c.l.b16 %v92
  %v281 = vunpack.c.h.b16 %v92
  %v282 = vunpack.c.l.b16 %v93
  %v283 = vunpack.c.h.b16 %v93
  %v284 = vunpack.c.l.b16 %v94
  %v285 = vunpack.c.h.b16 %v94
  %v286 = vunpack.c.l.b16 %v95
  %v287 = vunpack.c.h.b16 %v95
  %v288 = vunpack.c.l.b16 %v96
  %v289 = vunpack.c.h.b16 %v96
  %v290 = vunpack.c.l.b16 %v97
  %v291 = vunpack.c.h.b16 %v97
  %v292 = vunpack.c.l.b16 %v98
  %v293 = vunpack.c.h.b16 %v98
  %v294 = vunpack.c.l.b16 %v99
  %v295 = vunpack.c.h.b16 %v99
  %v296 = vunpack.c.l.b16 %v100
  %v297 = vunpack.c.h.b16 %v100
  %v298 = vunpack.c.l.b16 %v101
  %v299 = vunpack.c.h.b16 %v101
  %v300 = vunpack.c.l.b16 %v102
  %v301 = vunpack.c.h.b16 %v102
  %v302 = vunpack.c.l.b16 %v103
  %v303 = vunpack.c.h.b16 %v103
  %v304 = vunpack.c.l.b16 %v104
  %v305 = vunpack.c.h.b16 %v104
  %v306 = vunpack.c.l.b16 %v105
  %v307 = vunpack.c.h.b16 %v105
  %v308 = vpack.c.b16 %v184, %v180
  %v309 = vpack.c.b16 %v185, %v181
  %v310 = vpack.c.b16 %v186, %v182
  %v311 = vpack.c.b16 %v187, %v183
  %v312 = vpack.c.b16 %v192, %v188
  %v313 = vpack.c.b16 %v193, %v189
  %v314 = vpack.c.b16 %v194, %v190
  %v315 = vpack.c.b16 %v195, %v191
  %v316 = vpack.c.b16 %v200, %v196
  %v317 = vpack.c.b16 %v201, %v197
  %v318 = vpack.c.b16 %v202, %v198
  %v319 = vpack.c.b16 %v203, %v199
  %v320 = vpack.c.b16 %v208, %v204
  %v321 = vpack.c.b16 %v209, %v205
  %v322 = vpack.c.b16 %v210, %v206
  %v323 = vpack.c.b16 %v211, %v207
  %v324 = vpack.c.b16 %v216, %v212
  %v325 = vpack.c.b16 %v217, %v213
  %v326 = vpack.c.b16 %v218, %v214
  %v327 = vpack.c.b16 %v219, %v215
  %v328 = vpack.c.b16 %v224, %v220
  %v329 = vpack.c.b16 %v225, %v221
  %v330 = vpack.c.b16 %v226, %v222
  %v331 = vpack.c.b16 %v227, %v223
  %v332 = vpack.c.b16 %v232, %v228
  %v333 = vpack.c.b16 %v233, %v229
  %v334 = vpack.c.b16 %v234, %v230
  %v335 = vpack.c.b16 %v235, %v231
  %v336 = vpack.c.b16 %v240, %v236
  %v337 = vpack.c.b16 %v241, %v237
  %v338 = vpack.c.b16 %v242, %v238
  %v339 = vpack.c.b16 %v243, %v239
  %v340 = vpack.c.b16 %v248, %v244
  %v341 = vpack.c.b16 %v249, %v245
  %v342 = vpack.c.b16 %v250, %v246
  %v343 = vpack.c.b16 %v251, %v247
  %v344 = vpack.c.b16 %v256, %v252
  %v345 = vpack.c.b16 %v257, %v253
  %v346 = vpack.c.b16 %v258, %v254
  %v347 = vpack.c.b16 %v259, %v255
  %v348 = vpack.c.b16 %v264, %v260
  %v349 = vpack.c.b16 %v265, %v261
  %v350 = vpack.c.b16 %v266, %v262
  %v351 = vpack.c.b16 %v267, %v263
  %v352 = vpack.c.b16 %v272, %v268
  %v353 = vpack.c.b16 %v273, %v269
  %v354 = vpack.c.b16 %v274, %v270
  %v355 = vpack.c.b16 %v275, %v271
  %v356 = vpack.c.b16 %v280, %v276
  %v357 = vpack.c.b16 %v281, %v277
  %v358 = vpack.c.b16 %v282, %v278
  %v359 = vpack.c.b16 %v283, %v279
  %v360 = vpack.c.b16 %v288, %v284
  %v361 = vpack.c.b16 %v289, %v285
  %v362 = vpack.c.b16 %v290, %v286
  %v363 = vpack.c.b16 %v291, %v287
  %v364 = vpack.c.b16 %v296, %v292
  %v365 = vpack.c.b16 %v297, %v293
  %v366 = vpack.c.b16 %v298, %v294
  %v367 = vpack.c.b16 %v299, %v295
  %v368 = vpack.c.b16 %v304, %v300
  %v369 = vpack.c.b16 %v305, %v301
  %v370 = vpack.c.b16 %v306, %v302
  %v371 = vpack.c.b16 %v307, %v303
  %436 = vmatpush.bf16.msra.mxu0 %v336
  %437 = vmatpush.bf16.msra.mxu0 %v332
  %438 = vmatpush.bf16.msra.mxu0 %v328
  %439 = vmatpush.bf16.msra.mxu0 %v324
  %440 = vmatpush.bf16.msra.mxu0 %v320
  %441 = vmatpush.bf16.msra.mxu0 %v316
  %442 = vmatpush.bf16.msra.mxu0 %v312
  %443 = vmatpush.bf16.msra.mxu0 %v308
  %444 = vmatmul.bf16.gmra.mxu0 %v40
  %v445 = vpop.f32.mrf.mxu0
  %v446 = vadd.f32 %v108, %v445
  %v447 = vpop.f32.mrf.mxu0
  %448 = vdwg.mxu0
  %449 = vmatpush.bf16.msra.mxu0 %v368
  %450 = vmatpush.bf16.msra.mxu0 %v364
  %451 = vmatpush.bf16.msra.mxu0 %v360
  %452 = vmatpush.bf16.msra.mxu0 %v356
  %453 = vmatpush.bf16.msra.mxu0 %v352
  %454 = vmatpush.bf16.msra.mxu0 %v348
  %455 = vmatpush.bf16.msra.mxu0 %v344
  %456 = vmatpush.bf16.msra.mxu0 %v340
  %457 = vmatmul.bf16.gmra.mxu0 %v41
  %v458 = vpop.f32.mrf.mxu0
  %v459 = vadd.f32 %v446, %v458
  %v460 = vpop.f32.mrf.mxu0
  %461 = vdwg.mxu0
  %462 = vmatpush.bf16.msra.mxu0 %v337
  %463 = vmatpush.bf16.msra.mxu0 %v333
  %464 = vmatpush.bf16.msra.mxu0 %v329
  %465 = vmatpush.bf16.msra.mxu0 %v325
  %466 = vmatpush.bf16.msra.mxu0 %v321
  %467 = vmatpush.bf16.msra.mxu0 %v317
  %468 = vmatpush.bf16.msra.mxu0 %v313
  %469 = vmatpush.bf16.msra.mxu0 %v309
  %470 = vmatmul.bf16.gmra.mxu0 %v40
  %v471 = vpop.f32.mrf.mxu0
  %v472 = vadd.f32 %v109, %v471
  %v473 = vpop.f32.mrf.mxu0
  %474 = vdwg.mxu0
  %475 = vmatpush.bf16.msra.mxu0 %v369
  %476 = vmatpush.bf16.msra.mxu0 %v365
  %477 = vmatpush.bf16.msra.mxu0 %v361
  %478 = vmatpush.bf16.msra.mxu0 %v357
  %479 = vmatpush.bf16.msra.mxu0 %v353
  %480 = vmatpush.bf16.msra.mxu0 %v349
  %481 = vmatpush.bf16.msra.mxu0 %v345
  %482 = vmatpush.bf16.msra.mxu0 %v341
  %483 = vmatmul.bf16.gmra.mxu0 %v41
  %v484 = vpop.f32.mrf.mxu0
  %v485 = vadd.f32 %v472, %v484
  %v486 = vpop.f32.mrf.mxu0
  %487 = vdwg.mxu0
  %488 = vmatpush.bf16.msra.mxu0 %v338
  %489 = vmatpush.bf16.msra.mxu0 %v334
  %490 = vmatpush.bf16.msra.mxu0 %v330
  %491 = vmatpush.bf16.msra.mxu0 %v326
  %492 = vmatpush.bf16.msra.mxu0 %v322
  %493 = vmatpush.bf16.msra.mxu0 %v318
  %494 = vmatpush.bf16.msra.mxu0 %v314
  %495 = vmatpush.bf16.msra.mxu0 %v310
  %496 = vmatmul.bf16.gmra.mxu0 %v40
  %v497 = vpop.f32.mrf.mxu0
  %v498 = vadd.f32 %v110, %v497
  %v499 = vpop.f32.mrf.mxu0
  %500 = vdwg.mxu0
  %501 = vmatpush.bf16.msra.mxu0 %v370
  %502 = vmatpush.bf16.msra.mxu0 %v366
  %503 = vmatpush.bf16.msra.mxu0 %v362
  %504 = vmatpush.bf16.msra.mxu0 %v358
  %505 = vmatpush.bf16.msra.mxu0 %v354
  %506 = vmatpush.bf16.msra.mxu0 %v350
  %507 = vmatpush.bf16.msra.mxu0 %v346
  %508 = vmatpush.bf16.msra.mxu0 %v342
  %509 = vmatmul.bf16.gmra.mxu0 %v41
  %v510 = vpop.f32.mrf.mxu0
  %v511 = vadd.f32 %v498, %v510
  %v512 = vpop.f32.mrf.mxu0
  %513 = vdwg.mxu0
  %514 = vmatpush.bf16.msra.mxu0 %v339
  %515 = vmatpush.bf16.msra.mxu0 %v335
  %516 = vmatpush.bf16.msra.mxu0 %v331
  %517 = vmatpush.bf16.msra.mxu0 %v327
  %518 = vmatpush.bf16.msra.mxu0 %v323
  %519 = vmatpush.bf16.msra.mxu0 %v319
  %520 = vmatpush.bf16.msra.mxu0 %v315
  %521 = vmatpush.bf16.msra.mxu0 %v311
  %522 = vmatmul.bf16.gmra.mxu0 %v40
  %v523 = vpop.f32.mrf.mxu0
  %v524 = vadd.f32 %v111, %v523
  %v525 = vpop.f32.mrf.mxu0
  %526 = vdwg.mxu0
  %527 = vmatpush.bf16.msra.mxu0 %v371
  %528 = vmatpush.bf16.msra.mxu0 %v367
  %529 = vmatpush.bf16.msra.mxu0 %v363
  %530 = vmatpush.bf16.msra.mxu0 %v359
  %531 = vmatpush.bf16.msra.mxu0 %v355
  %532 = vmatpush.bf16.msra.mxu0 %v351
  %533 = vmatpush.bf16.msra.mxu0 %v347
  %534 = vmatpush.bf16.msra.mxu0 %v343
  %535 = vmatmul.bf16.gmra.mxu0 %v41
  %v536 = vpop.f32.mrf.mxu0
  %v537 = vadd.f32 %v524, %v536
  %v538 = vpop.f32.mrf.mxu0
  %539 = vdwg.mxu0
  %vm540 = vcmp.ge.f32.partialorder %v459, 0.0
  %vm541 = vcmp.ge.f32.partialorder %v485, 0.0
  %vm542 = vcmp.ge.f32.partialorder %v511, 0.0
  %vm543 = vcmp.ge.f32.partialorder %v537, 0.0
  %v544 = vmul.f32 %v459, 0.2
  %v545 = vmul.f32 %v485, 0.2
  %v546 = vmul.f32 %v511, 0.2
  %v547 = vmul.f32 %v537, 0.2
  %v548 = vsel %vm540, %v459, %v544
  %v549 = vsel %vm541, %v485, %v545
  %v550 = vsel %vm542, %v511, %v546
  %v551 = vsel %vm543, %v537, %v547
  %v552 = vpack.c.bf16 %v548, %v548
  %v553 = vpack.c.bf16 %v549, %v549
  %v554 = vpack.c.bf16 %v550, %v550
  %v555 = vpack.c.bf16 %v551, %v551
  %v556 = vld [vmem:[%s3] sm:$0xff]
  %v557 = vld [vmem:[%s3 + $0x8] sm:$0xf]
  %v558 = vld [vmem:[%s3 + $0xc] sm:$0xff]
  %v559 = vld [vmem:[%s3 + $0x14] sm:$0xf]
  %v560 = vld [vmem:[%s3 + $0x18] sm:$0xff]
  %v561 = vld [vmem:[%s3 + $0x20] sm:$0xf]
  %v562 = vld [vmem:[%s3 + $0x24] sm:$0xff]
  %v563 = vld [vmem:[%s3 + $0x2c] sm:$0xf]
  %v564 = vld [vmem:[%s3 + $0x30] sm:$0xff]
  %v565 = vld [vmem:[%s3 + $0x38] sm:$0xf]
  %v566 = vld [vmem:[%s3 + $0x3c] sm:$0xff]
  %v567 = vld [vmem:[%s3 + $0x44] sm:$0xf]
  %v568 = vld [vmem:[%s3 + $0x48] sm:$0xff]
  %v569 = vld [vmem:[%s3 + $0x50] sm:$0xf]
  %v570 = vld [vmem:[%s3 + $0x54] sm:$0xff]
  %v571 = vld [vmem:[%s3 + $0x5c] sm:$0xf]
  %v572 = vld [vmem:[%s3 + $0x60] sm:$0xff]
  %v573 = vld [vmem:[%s3 + $0x68] sm:$0xf]
  %v574 = vld [vmem:[%s3 + $0x6c] sm:$0xff]
  %v575 = vld [vmem:[%s3 + $0x74] sm:$0xf]
  %v576 = vld [vmem:[%s3 + $0x78] sm:$0xff]
  %v577 = vld [vmem:[%s3 + $0x80] sm:$0xf]
  %v578 = vld [vmem:[%s3 + $0x84] sm:$0xff]
  %v579 = vld [vmem:[%s3 + $0x8c] sm:$0xf]
  %v580 = vld [vmem:[%s3 + $0x90] sm:$0xff]
  %v581 = vld [vmem:[%s3 + $0x98] sm:$0xf]
  %v582 = vld [vmem:[%s3 + $0x9c] sm:$0xff]
  %v583 = vld [vmem:[%s3 + $0xa4] sm:$0xf]
  %v584 = vld [vmem:[%s3 + $0xa8] sm:$0xff]
  %v585 = vld [vmem:[%s3 + $0xb0] sm:$0xf]
  %v586 = vld [vmem:[%s3 + $0xb4] sm:$0xff]
  %v587 = vld [vmem:[%s3 + $0xbc] sm:$0xf]
  %v588 = vld [vmem:[%s3 + $0xc0] sm:$0xff]
  %v589 = vld [vmem:[%s3 + $0xc8] sm:$0xf]
  %v590 = vld [vmem:[%s3 + $0xcc] sm:$0xff]
  %v591 = vld [vmem:[%s3 + $0xd4] sm:$0xf]
  %v592 = vld [vmem:[%s3 + $0xd8] sm:$0xff]
  %v593 = vld [vmem:[%s3 + $0xe0] sm:$0xf]
  %v594 = vld [vmem:[%s3 + $0xe4] sm:$0xff]
  %v595 = vld [vmem:[%s3 + $0xec] sm:$0xf]
  %v596 = vld [vmem:[%s3 + $0xf0] sm:$0xff]
  %v597 = vld [vmem:[%s3 + $0xf8] sm:$0xf]
  %v598 = vld [vmem:[%s3 + $0xfc] sm:$0xff]
  %v599 = vld [vmem:[%s3 + $0x104] sm:$0xf]
  %v600 = vld [vmem:[%s3 + $0x108] sm:$0xff]
  %v601 = vld [vmem:[%s3 + $0x110] sm:$0xf]
  %v602 = vld [vmem:[%s3 + $0x114] sm:$0xff]
  %v603 = vld [vmem:[%s3 + $0x11c] sm:$0xf]
  %v604 = vld [vmem:[%s3 + $0x120] sm:$0xff]
  %v605 = vld [vmem:[%s3 + $0x128] sm:$0xf]
  %v606 = vld [vmem:[%s3 + $0x12c] sm:$0xff]
  %v607 = vld [vmem:[%s3 + $0x134] sm:$0xf]
  %v608 = vld [vmem:[%s3 + $0x138] sm:$0xff]
  %v609 = vld [vmem:[%s3 + $0x140] sm:$0xf]
  %v610 = vld [vmem:[%s3 + $0x144] sm:$0xff]
  %v611 = vld [vmem:[%s3 + $0x14c] sm:$0xf]
  %v612 = vld [vmem:[%s3 + $0x150] sm:$0xff]
  %v613 = vld [vmem:[%s3 + $0x158] sm:$0xf]
  %v614 = vld [vmem:[%s3 + $0x15c] sm:$0xff]
  %v615 = vld [vmem:[%s3 + $0x164] sm:$0xf]
  %v616 = vld [vmem:[%s3 + $0x168] sm:$0xff]
  %v617 = vld [vmem:[%s3 + $0x170] sm:$0xf]
  %v618 = vld [vmem:[%s3 + $0x174] sm:$0xff]
  %v619 = vld [vmem:[%s3 + $0x17c] sm:$0xf]
  %v620 = vld [vmem:[%s3 + $0x180] sm:$0xff]
  %v621 = vld [vmem:[%s3 + $0x188] sm:$0xf]
  %v622 = vld [vmem:[%s3 + $0x18c] sm:$0xff]
  %v623 = vld [vmem:[%s3 + $0x194] sm:$0xf]
  %v624 = vld [vmem:[%s3 + $0x198] sm:$0xff]
  %v625 = vld [vmem:[%s3 + $0x1a0] sm:$0xf]
  %v626 = vld [vmem:[%s3 + $0x1a4] sm:$0xff]
  %v627 = vld [vmem:[%s3 + $0x1ac] sm:$0xf]
  %v628 = vld [vmem:[%s3 + $0x1b0] sm:$0xff]
  %v629 = vld [vmem:[%s3 + $0x1b8] sm:$0xf]
  %v630 = vld [vmem:[%s3 + $0x1bc] sm:$0xff]
  %v631 = vld [vmem:[%s3 + $0x1c4] sm:$0xf]
  %v632 = vld [vmem:[%s3 + $0x1c8] sm:$0xff]
  %v633 = vld [vmem:[%s3 + $0x1d0] sm:$0xf]
  %v634 = vld [vmem:[%s3 + $0x1d4] sm:$0xff]
  %v635 = vld [vmem:[%s3 + $0x1dc] sm:$0xf]
  %v636 = vld [vmem:[%s3 + $0x1e0] sm:$0xff]
  %v637 = vld [vmem:[%s3 + $0x1e8] sm:$0xf]
  %v638 = vld [vmem:[%s3 + $0x1ec] sm:$0xff]
  %v639 = vld [vmem:[%s3 + $0x1f4] sm:$0xf]
  %v640 = vld [vmem:[%s3 + $0x1f8] sm:$0xff]
  %v641 = vld [vmem:[%s3 + $0x200] sm:$0xf]
  %v642 = vld [vmem:[%s3 + $0x204] sm:$0xff]
  %v643 = vld [vmem:[%s3 + $0x20c] sm:$0xf]
  %v644 = vld [vmem:[%s3 + $0x210] sm:$0xff]
  %v645 = vld [vmem:[%s3 + $0x218] sm:$0xf]
  %v646 = vld [vmem:[%s3 + $0x21c] sm:$0xff]
  %v647 = vld [vmem:[%s3 + $0x224] sm:$0xf]
  %v648 = vld [vmem:[%s3 + $0x228] sm:$0xff]
  %v649 = vld [vmem:[%s3 + $0x230] sm:$0xf]
  %v650 = vld [vmem:[%s3 + $0x234] sm:$0xff]
  %v651 = vld [vmem:[%s3 + $0x23c] sm:$0xf]
  %v652 = vld [vmem:[%s3 + $0x240] sm:$0xff]
  %v653 = vld [vmem:[%s3 + $0x248] sm:$0xf]
  %v654 = vld [vmem:[%s3 + $0x24c] sm:$0xff]
  %v655 = vld [vmem:[%s3 + $0x254] sm:$0xf]
  %v656 = vld [vmem:[%s3 + $0x258] sm:$0xff]
  %v657 = vld [vmem:[%s3 + $0x260] sm:$0xf]
  %v658 = vld [vmem:[%s3 + $0x264] sm:$0xff]
  %v659 = vld [vmem:[%s3 + $0x26c] sm:$0xf]
  %v660 = vld [vmem:[%s3 + $0x270] sm:$0xff]
  %v661 = vld [vmem:[%s3 + $0x278] sm:$0xf]
  %v662 = vld [vmem:[%s3 + $0x27c] sm:$0xff]
  %v663 = vld [vmem:[%s3 + $0x284] sm:$0xf]
  %v664 = vld [vmem:[%s3 + $0x288] sm:$0xff]
  %v665 = vld [vmem:[%s3 + $0x290] sm:$0xf]
  %v666 = vld [vmem:[%s3 + $0x294] sm:$0xff]
  %v667 = vld [vmem:[%s3 + $0x29c] sm:$0xf]
  %v668 = vld [vmem:[%s3 + $0x2a0] sm:$0xff]
  %v669 = vld [vmem:[%s3 + $0x2a8] sm:$0xf]
  %v670 = vld [vmem:[%s3 + $0x2ac] sm:$0xff]
  %v671 = vld [vmem:[%s3 + $0x2b4] sm:$0xf]
  %v672 = vld [vmem:[%s3 + $0x2b8] sm:$0xff]
  %v673 = vld [vmem:[%s3 + $0x2c0] sm:$0xf]
  %v674 = vld [vmem:[%s3 + $0x2c4] sm:$0xff]
  %v675 = vld [vmem:[%s3 + $0x2cc] sm:$0xf]
  %v676 = vld [vmem:[%s3 + $0x2d0] sm:$0xff]
  %v677 = vld [vmem:[%s3 + $0x2d8] sm:$0xf]
  %v678 = vld [vmem:[%s3 + $0x2dc] sm:$0xff]
  %v679 = vld [vmem:[%s3 + $0x2e4] sm:$0xf]
  %v680 = vld [vmem:[%s3 + $0x2e8] sm:$0xff]
  %v681 = vld [vmem:[%s3 + $0x2f0] sm:$0xf]
  %v682 = vld [vmem:[%s3 + $0x2f4] sm:$0xff]
  %v683 = vld [vmem:[%s3 + $0x2fc] sm:$0xf]
  %v684 = vld [vmem:[%s4] sm:$0x7]
  %v686 = vperm.slane %v684, 0
  %v687 = vperm.slane %v684, 1
  %v688 = vperm.slane %v684, 2
  %v820 = vunpack.c.l.b16 %v556
  %v821 = vunpack.c.h.b16 %v556
  %v822 = vunpack.c.l.b16 %v557
  %v823 = vunpack.c.l.b16 %v558
  %v824 = vunpack.c.h.b16 %v558
  %v825 = vunpack.c.l.b16 %v559
  %v826 = vunpack.c.l.b16 %v560
  %v827 = vunpack.c.h.b16 %v560
  %v828 = vunpack.c.l.b16 %v561
  %v829 = vunpack.c.l.b16 %v562
  %v830 = vunpack.c.h.b16 %v562
  %v831 = vunpack.c.l.b16 %v563
  %v832 = vunpack.c.l.b16 %v564
  %v833 = vunpack.c.h.b16 %v564
  %v834 = vunpack.c.l.b16 %v565
  %v835 = vunpack.c.l.b16 %v566
  %v836 = vunpack.c.h.b16 %v566
  %v837 = vunpack.c.l.b16 %v567
  %v838 = vunpack.c.l.b16 %v568
  %v839 = vunpack.c.h.b16 %v568
  %v840 = vunpack.c.l.b16 %v569
  %v841 = vunpack.c.l.b16 %v570
  %v842 = vunpack.c.h.b16 %v570
  %v843 = vunpack.c.l.b16 %v571
  %v844 = vunpack.c.l.b16 %v572
  %v845 = vunpack.c.h.b16 %v572
  %v846 = vunpack.c.l.b16 %v573
  %v847 = vunpack.c.l.b16 %v574
  %v848 = vunpack.c.h.b16 %v574
  %v849 = vunpack.c.l.b16 %v575
  %v850 = vunpack.c.l.b16 %v576
  %v851 = vunpack.c.h.b16 %v576
  %v852 = vunpack.c.l.b16 %v577
  %v853 = vunpack.c.l.b16 %v578
  %v854 = vunpack.c.h.b16 %v578
  %v855 = vunpack.c.l.b16 %v579
  %v856 = vunpack.c.l.b16 %v580
  %v857 = vunpack.c.h.b16 %v580
  %v858 = vunpack.c.l.b16 %v581
  %v859 = vunpack.c.l.b16 %v582
  %v860 = vunpack.c.h.b16 %v582
  %v861 = vunpack.c.l.b16 %v583
  %v862 = vunpack.c.l.b16 %v584
  %v863 = vunpack.c.h.b16 %v584
  %v864 = vunpack.c.l.b16 %v585
  %v865 = vunpack.c.l.b16 %v586
  %v866 = vunpack.c.h.b16 %v586
  %v867 = vunpack.c.l.b16 %v587
  %v868 = vunpack.c.l.b16 %v588
  %v869 = vunpack.c.h.b16 %v588
  %v870 = vunpack.c.l.b16 %v589
  %v871 = vunpack.c.l.b16 %v590
  %v872 = vunpack.c.h.b16 %v590
  %v873 = vunpack.c.l.b16 %v591
  %v874 = vunpack.c.l.b16 %v592
  %v875 = vunpack.c.h.b16 %v592
  %v876 = vunpack.c.l.b16 %v593
  %v877 = vunpack.c.l.b16 %v594
  %v878 = vunpack.c.h.b16 %v594
  %v879 = vunpack.c.l.b16 %v595
  %v880 = vunpack.c.l.b16 %v596
  %v881 = vunpack.c.h.b16 %v596
  %v882 = vunpack.c.l.b16 %v597
  %v883 = vunpack.c.l.b16 %v598
  %v884 = vunpack.c.h.b16 %v598
  %v885 = vunpack.c.l.b16 %v599
  %v886 = vunpack.c.l.b16 %v600
  %v887 = vunpack.c.h.b16 %v600
  %v888 = vunpack.c.l.b16 %v601
  %v889 = vunpack.c.l.b16 %v602
  %v890 = vunpack.c.h.b16 %v602
  %v891 = vunpack.c.l.b16 %v603
  %v892 = vunpack.c.l.b16 %v604
  %v893 = vunpack.c.h.b16 %v604
  %v894 = vunpack.c.l.b16 %v605
  %v895 = vunpack.c.l.b16 %v606
  %v896 = vunpack.c.h.b16 %v606
  %v897 = vunpack.c.l.b16 %v607
  %v898 = vunpack.c.l.b16 %v608
  %v899 = vunpack.c.h.b16 %v608
  %v900 = vunpack.c.l.b16 %v609
  %v901 = vunpack.c.l.b16 %v610
  %v902 = vunpack.c.h.b16 %v610
  %v903 = vunpack.c.l.b16 %v611
  %v904 = vunpack.c.l.b16 %v612
  %v905 = vunpack.c.h.b16 %v612
  %v906 = vunpack.c.l.b16 %v613
  %v907 = vunpack.c.l.b16 %v614
  %v908 = vunpack.c.h.b16 %v614
  %v909 = vunpack.c.l.b16 %v615
  %v910 = vunpack.c.l.b16 %v616
  %v911 = vunpack.c.h.b16 %v616
  %v912 = vunpack.c.l.b16 %v617
  %v913 = vunpack.c.l.b16 %v618
  %v914 = vunpack.c.h.b16 %v618
  %v915 = vunpack.c.l.b16 %v619
  %v916 = vunpack.c.l.b16 %v620
  %v917 = vunpack.c.h.b16 %v620
  %v918 = vunpack.c.l.b16 %v621
  %v919 = vunpack.c.l.b16 %v622
  %v920 = vunpack.c.h.b16 %v622
  %v921 = vunpack.c.l.b16 %v623
  %v922 = vunpack.c.l.b16 %v624
  %v923 = vunpack.c.h.b16 %v624
  %v924 = vunpack.c.l.b16 %v625
  %v925 = vunpack.c.l.b16 %v626
  %v926 = vunpack.c.h.b16 %v626
  %v927 = vunpack.c.l.b16 %v627
  %v928 = vunpack.c.l.b16 %v628
  %v929 = vunpack.c.h.b16 %v628
  %v930 = vunpack.c.l.b16 %v629
  %v931 = vunpack.c.l.b16 %v630
  %v932 = vunpack.c.h.b16 %v630
  %v933 = vunpack.c.l.b16 %v631
  %v934 = vunpack.c.l.b16 %v632
  %v935 = vunpack.c.h.b16 %v632
  %v936 = vunpack.c.l.b16 %v633
  %v937 = vunpack.c.l.b16 %v634
  %v938 = vunpack.c.h.b16 %v634
  %v939 = vunpack.c.l.b16 %v635
  %v940 = vunpack.c.l.b16 %v636
  %v941 = vunpack.c.h.b16 %v636
  %v942 = vunpack.c.l.b16 %v637
  %v943 = vunpack.c.l.b16 %v638
  %v944 = vunpack.c.h.b16 %v638
  %v945 = vunpack.c.l.b16 %v639
  %v946 = vunpack.c.l.b16 %v640
  %v947 = vunpack.c.h.b16 %v640
  %v948 = vunpack.c.l.b16 %v641
  %v949 = vunpack.c.l.b16 %v642
  %v950 = vunpack.c.h.b16 %v642
  %v951 = vunpack.c.l.b16 %v643
  %v952 = vunpack.c.l.b16 %v644
  %v953 = vunpack.c.h.b16 %v644
  %v954 = vunpack.c.l.b16 %v645
  %v955 = vunpack.c.l.b16 %v646
  %v956 = vunpack.c.h.b16 %v646
  %v957 = vunpack.c.l.b16 %v647
  %v958 = vunpack.c.l.b16 %v648
  %v959 = vunpack.c.h.b16 %v648
  %v960 = vunpack.c.l.b16 %v649
  %v961 = vunpack.c.l.b16 %v650
  %v962 = vunpack.c.h.b16 %v650
  %v963 = vunpack.c.l.b16 %v651
  %v964 = vunpack.c.l.b16 %v652
  %v965 = vunpack.c.h.b16 %v652
  %v966 = vunpack.c.l.b16 %v653
  %v967 = vunpack.c.l.b16 %v654
  %v968 = vunpack.c.h.b16 %v654
  %v969 = vunpack.c.l.b16 %v655
  %v970 = vunpack.c.l.b16 %v656
  %v971 = vunpack.c.h.b16 %v656
  %v972 = vunpack.c.l.b16 %v657
  %v973 = vunpack.c.l.b16 %v658
  %v974 = vunpack.c.h.b16 %v658
  %v975 = vunpack.c.l.b16 %v659
  %v976 = vunpack.c.l.b16 %v660
  %v977 = vunpack.c.h.b16 %v660
  %v978 = vunpack.c.l.b16 %v661
  %v979 = vunpack.c.l.b16 %v662
  %v980 = vunpack.c.h.b16 %v662
  %v981 = vunpack.c.l.b16 %v663
  %v982 = vunpack.c.l.b16 %v664
  %v983 = vunpack.c.h.b16 %v664
  %v984 = vunpack.c.l.b16 %v665
  %v985 = vunpack.c.l.b16 %v666
  %v986 = vunpack.c.h.b16 %v666
  %v987 = vunpack.c.l.b16 %v667
  %v988 = vunpack.c.l.b16 %v668
  %v989 = vunpack.c.h.b16 %v668
  %v990 = vunpack.c.l.b16 %v669
  %v991 = vunpack.c.l.b16 %v670
  %v992 = vunpack.c.h.b16 %v670
  %v993 = vunpack.c.l.b16 %v671
  %v994 = vunpack.c.l.b16 %v672
  %v995 = vunpack.c.h.b16 %v672
  %v996 = vunpack.c.l.b16 %v673
  %v997 = vunpack.c.l.b16 %v674
  %v998 = vunpack.c.h.b16 %v674
  %v999 = vunpack.c.l.b16 %v675
  %v1000 = vunpack.c.l.b16 %v676
  %v1001 = vunpack.c.h.b16 %v676
  %v1002 = vunpack.c.l.b16 %v677
  %v1003 = vunpack.c.l.b16 %v678
  %v1004 = vunpack.c.h.b16 %v678
  %v1005 = vunpack.c.l.b16 %v679
  %v1006 = vunpack.c.l.b16 %v680
  %v1007 = vunpack.c.h.b16 %v680
  %v1008 = vunpack.c.l.b16 %v681
  %v1009 = vunpack.c.l.b16 %v682
  %v1010 = vunpack.c.h.b16 %v682
  %v1011 = vunpack.c.l.b16 %v683
  %v1012 = vpack.c.b16 %v823, %v820
  %v1013 = vpack.c.b16 %v824, %v821
  %v1014 = vpack.c.b16 %v825, %v822
  %v1015 = vpack.c.b16 %v829, %v826
  %v1016 = vpack.c.b16 %v830, %v827
  %v1017 = vpack.c.b16 %v831, %v828
  %v1018 = vpack.c.b16 %v835, %v832
  %v1019 = vpack.c.b16 %v836, %v833
  %v1020 = vpack.c.b16 %v837, %v834
  %v1021 = vpack.c.b16 %v841, %v838
  %v1022 = vpack.c.b16 %v842, %v839
  %v1023 = vpack.c.b16 %v843, %v840
  %v1024 = vpack.c.b16 %v847, %v844
  %v1025 = vpack.c.b16 %v848, %v845
  %v1026 = vpack.c.b16 %v849, %v846
  %v1027 = vpack.c.b16 %v853, %v850
  %v1028 = vpack.c.b16 %v854, %v851
  %v1029 = vpack.c.b16 %v855, %v852
  %v1030 = vpack.c.b16 %v859, %v856
  %v1031 = vpack.c.b16 %v860, %v857
  %v1032 = vpack.c.b16 %v861, %v858
  %v1033 = vpack.c.b16 %v865, %v862
  %v1034 = vpack.c.b16 %v866, %v863
  %v1035 = vpack.c.b16 %v867, %v864
  %v1036 = vpack.c.b16 %v871, %v868
  %v1037 = vpack.c.b16 %v872, %v869
  %v1038 = vpack.c.b16 %v873, %v870
  %v1039 = vpack.c.b16 %v877, %v874
  %v1040 = vpack.c.b16 %v878, %v875
  %v1041 = vpack.c.b16 %v879, %v876
  %v1042 = vpack.c.b16 %v883, %v880
  %v1043 = vpack.c.b16 %v884, %v881
  %v1044 = vpack.c.b16 %v885, %v882
  %v1045 = vpack.c.b16 %v889, %v886
  %v1046 = vpack.c.b16 %v890, %v887
  %v1047 = vpack.c.b16 %v891, %v888
  %v1048 = vpack.c.b16 %v895, %v892
  %v1049 = vpack.c.b16 %v896, %v893
  %v1050 = vpack.c.b16 %v897, %v894
  %v1051 = vpack.c.b16 %v901, %v898
  %v1052 = vpack.c.b16 %v902, %v899
  %v1053 = vpack.c.b16 %v903, %v900
  %v1054 = vpack.c.b16 %v907, %v904
  %v1055 = vpack.c.b16 %v908, %v905
  %v1056 = vpack.c.b16 %v909, %v906
  %v1057 = vpack.c.b16 %v913, %v910
  %v1058 = vpack.c.b16 %v914, %v911
  %v1059 = vpack.c.b16 %v915, %v912
  %v1060 = vpack.c.b16 %v919, %v916
  %v1061 = vpack.c.b16 %v920, %v917
  %v1062 = vpack.c.b16 %v921, %v918
  %v1063 = vpack.c.b16 %v925, %v922
  %v1064 = vpack.c.b16 %v926, %v923
  %v1065 = vpack.c.b16 %v927, %v924
  %v1066 = vpack.c.b16 %v931, %v928
  %v1067 = vpack.c.b16 %v932, %v929
  %v1068 = vpack.c.b16 %v933, %v930
  %v1069 = vpack.c.b16 %v937, %v934
  %v1070 = vpack.c.b16 %v938, %v935
  %v1071 = vpack.c.b16 %v939, %v936
  %v1072 = vpack.c.b16 %v943, %v940
  %v1073 = vpack.c.b16 %v944, %v941
  %v1074 = vpack.c.b16 %v945, %v942
  %v1075 = vpack.c.b16 %v949, %v946
  %v1076 = vpack.c.b16 %v950, %v947
  %v1077 = vpack.c.b16 %v951, %v948
  %v1078 = vpack.c.b16 %v955, %v952
  %v1079 = vpack.c.b16 %v956, %v953
  %v1080 = vpack.c.b16 %v957, %v954
  %v1081 = vpack.c.b16 %v961, %v958
  %v1082 = vpack.c.b16 %v962, %v959
  %v1083 = vpack.c.b16 %v963, %v960
  %v1084 = vpack.c.b16 %v967, %v964
  %v1085 = vpack.c.b16 %v968, %v965
  %v1086 = vpack.c.b16 %v969, %v966
  %v1087 = vpack.c.b16 %v973, %v970
  %v1088 = vpack.c.b16 %v974, %v971
  %v1089 = vpack.c.b16 %v975, %v972
  %v1090 = vpack.c.b16 %v979, %v976
  %v1091 = vpack.c.b16 %v980, %v977
  %v1092 = vpack.c.b16 %v981, %v978
  %v1093 = vpack.c.b16 %v985, %v982
  %v1094 = vpack.c.b16 %v986, %v983
  %v1095 = vpack.c.b16 %v987, %v984
  %v1096 = vpack.c.b16 %v991, %v988
  %v1097 = vpack.c.b16 %v992, %v989
  %v1098 = vpack.c.b16 %v993, %v990
  %v1099 = vpack.c.b16 %v997, %v994
  %v1100 = vpack.c.b16 %v998, %v995
  %v1101 = vpack.c.b16 %v999, %v996
  %v1102 = vpack.c.b16 %v1003, %v1000
  %v1103 = vpack.c.b16 %v1004, %v1001
  %v1104 = vpack.c.b16 %v1005, %v1002
  %v1105 = vpack.c.b16 %v1009, %v1006
  %v1106 = vpack.c.b16 %v1010, %v1007
  %v1107 = vpack.c.b16 %v1011, %v1008
  %1204 = vmatpush.bf16.msra.mxu0 %v1033
  %1205 = vmatpush.bf16.msra.mxu0 %v1030
  %1206 = vmatpush.bf16.msra.mxu0 %v1027
  %1207 = vmatpush.bf16.msra.mxu0 %v1024
  %1208 = vmatpush.bf16.msra.mxu0 %v1021
  %1209 = vmatpush.bf16.msra.mxu0 %v1018
  %1210 = vmatpush.bf16.msra.mxu0 %v1015
  %1211 = vmatpush.bf16.msra.mxu0 %v1012
  %1212 = vmatmul.bf16.gmra.mxu0 %v552
  %v1213 = vpop.f32.mrf.mxu0
  %v1214 = vadd.f32 %v686, %v1213
  %v1215 = vpop.f32.mrf.mxu0
  %1216 = vdwg.mxu0
  %1217 = vmatpush.bf16.msra.mxu0 %v1057
  %1218 = vmatpush.bf16.msra.mxu0 %v1054
  %1219 = vmatpush.bf16.msra.mxu0 %v1051
  %1220 = vmatpush.bf16.msra.mxu0 %v1048
  %1221 = vmatpush.bf16.msra.mxu0 %v1045
  %1222 = vmatpush.bf16.msra.mxu0 %v1042
  %1223 = vmatpush.bf16.msra.mxu0 %v1039
  %1224 = vmatpush.bf16.msra.mxu0 %v1036
  %1225 = vmatmul.bf16.gmra.mxu0 %v553
  %v1226 = vpop.f32.mrf.mxu0
  %v1227 = vadd.f32 %v1214, %v1226
  %v1228 = vpop.f32.mrf.mxu0
  %1229 = vdwg.mxu0
  %1230 = vmatpush.bf16.msra.mxu0 %v1081
  %1231 = vmatpush.bf16.msra.mxu0 %v1078
  %1232 = vmatpush.bf16.msra.mxu0 %v1075
  %1233 = vmatpush.bf16.msra.mxu0 %v1072
  %1234 = vmatpush.bf16.msra.mxu0 %v1069
  %1235 = vmatpush.bf16.msra.mxu0 %v1066
  %1236 = vmatpush.bf16.msra.mxu0 %v1063
  %1237 = vmatpush.bf16.msra.mxu0 %v1060
  %1238 = vmatmul.bf16.gmra.mxu0 %v554
  %v1239 = vpop.f32.mrf.mxu0
  %v1240 = vadd.f32 %v1227, %v1239
  %v1241 = vpop.f32.mrf.mxu0
  %1242 = vdwg.mxu0
  %1243 = vmatpush.bf16.msra.mxu0 %v1105
  %1244 = vmatpush.bf16.msra.mxu0 %v1102
  %1245 = vmatpush.bf16.msra.mxu0 %v1099
  %1246 = vmatpush.bf16.msra.mxu0 %v1096
  %1247 = vmatpush.bf16.msra.mxu0 %v1093
  %1248 = vmatpush.bf16.msra.mxu0 %v1090
  %1249 = vmatpush.bf16.msra.mxu0 %v1087
  %1250 = vmatpush.bf16.msra.mxu0 %v1084
  %1251 = vmatmul.bf16.gmra.mxu0 %v555
  %v1252 = vpop.f32.mrf.mxu0
  %v1253 = vadd.f32 %v1240, %v1252
  %v1254 = vpop.f32.mrf.mxu0
  %1255 = vdwg.mxu0
  %1256 = vmatpush.bf16.msra.mxu0 %v1034
  %1257 = vmatpush.bf16.msra.mxu0 %v1031
  %1258 = vmatpush.bf16.msra.mxu0 %v1028
  %1259 = vmatpush.bf16.msra.mxu0 %v1025
  %1260 = vmatpush.bf16.msra.mxu0 %v1022
  %1261 = vmatpush.bf16.msra.mxu0 %v1019
  %1262 = vmatpush.bf16.msra.mxu0 %v1016
  %1263 = vmatpush.bf16.msra.mxu0 %v1013
  %1264 = vmatmul.bf16.gmra.mxu0 %v552
  %v1265 = vpop.f32.mrf.mxu0
  %v1266 = vadd.f32 %v687, %v1265
  %v1267 = vpop.f32.mrf.mxu0
  %1268 = vdwg.mxu0
  %1269 = vmatpush.bf16.msra.mxu0 %v1058
  %1270 = vmatpush.bf16.msra.mxu0 %v1055
  %1271 = vmatpush.bf16.msra.mxu0 %v1052
  %1272 = vmatpush.bf16.msra.mxu0 %v1049
  %1273 = vmatpush.bf16.msra.mxu0 %v1046
  %1274 = vmatpush.bf16.msra.mxu0 %v1043
  %1275 = vmatpush.bf16.msra.mxu0 %v1040
  %1276 = vmatpush.bf16.msra.mxu0 %v1037
  %1277 = vmatmul.bf16.gmra.mxu0 %v553
  %v1278 = vpop.f32.mrf.mxu0
  %v1279 = vadd.f32 %v1266, %v1278
  %v1280 = vpop.f32.mrf.mxu0
  %1281 = vdwg.mxu0
  %1282 = vmatpush.bf16.msra.mxu0 %v1082
  %1283 = vmatpush.bf16.msra.mxu0 %v1079
  %1284 = vmatpush.bf16.msra.mxu0 %v1076
  %1285 = vmatpush.bf16.msra.mxu0 %v1073
  %1286 = vmatpush.bf16.msra.mxu0 %v1070
  %1287 = vmatpush.bf16.msra.mxu0 %v1067
  %1288 = vmatpush.bf16.msra.mxu0 %v1064
  %1289 = vmatpush.bf16.msra.mxu0 %v1061
  %1290 = vmatmul.bf16.gmra.mxu0 %v554
  %v1291 = vpop.f32.mrf.mxu0
  %v1292 = vadd.f32 %v1279, %v1291
  %v1293 = vpop.f32.mrf.mxu0
  %1294 = vdwg.mxu0
  %1295 = vmatpush.bf16.msra.mxu0 %v1106
  %1296 = vmatpush.bf16.msra.mxu0 %v1103
  %1297 = vmatpush.bf16.msra.mxu0 %v1100
  %1298 = vmatpush.bf16.msra.mxu0 %v1097
  %1299 = vmatpush.bf16.msra.mxu0 %v1094
  %1300 = vmatpush.bf16.msra.mxu0 %v1091
  %1301 = vmatpush.bf16.msra.mxu0 %v1088
  %1302 = vmatpush.bf16.msra.mxu0 %v1085
  %1303 = vmatmul.bf16.gmra.mxu0 %v555
  %v1304 = vpop.f32.mrf.mxu0
  %v1305 = vadd.f32 %v1292, %v1304
  %v1306 = vpop.f32.mrf.mxu0
  %1307 = vdwg.mxu0
  %1308 = vmatpush.bf16.msra.mxu0 %v1035
  %1309 = vmatpush.bf16.msra.mxu0 %v1032
  %1310 = vmatpush.bf16.msra.mxu0 %v1029
  %1311 = vmatpush.bf16.msra.mxu0 %v1026
  %1312 = vmatpush.bf16.msra.mxu0 %v1023
  %1313 = vmatpush.bf16.msra.mxu0 %v1020
  %1314 = vmatpush.bf16.msra.mxu0 %v1017
  %1315 = vmatpush.bf16.msra.mxu0 %v1014
  %1316 = vmatmul.bf16.gmra.mxu0 %v552
  %v1317 = vpop.f32.mrf.mxu0
  %v1318 = vadd.f32 %v688, %v1317
  %v1319 = vpop.f32.mrf.mxu0
  %1320 = vdwg.mxu0
  %1321 = vmatpush.bf16.msra.mxu0 %v1059
  %1322 = vmatpush.bf16.msra.mxu0 %v1056
  %1323 = vmatpush.bf16.msra.mxu0 %v1053
  %1324 = vmatpush.bf16.msra.mxu0 %v1050
  %1325 = vmatpush.bf16.msra.mxu0 %v1047
  %1326 = vmatpush.bf16.msra.mxu0 %v1044
  %1327 = vmatpush.bf16.msra.mxu0 %v1041
  %1328 = vmatpush.bf16.msra.mxu0 %v1038
  %1329 = vmatmul.bf16.gmra.mxu0 %v553
  %v1330 = vpop.f32.mrf.mxu0
  %v1331 = vadd.f32 %v1318, %v1330
  %v1332 = vpop.f32.mrf.mxu0
  %1333 = vdwg.mxu0
  %1334 = vmatpush.bf16.msra.mxu0 %v1083
  %1335 = vmatpush.bf16.msra.mxu0 %v1080
  %1336 = vmatpush.bf16.msra.mxu0 %v1077
  %1337 = vmatpush.bf16.msra.mxu0 %v1074
  %1338 = vmatpush.bf16.msra.mxu0 %v1071
  %1339 = vmatpush.bf16.msra.mxu0 %v1068
  %1340 = vmatpush.bf16.msra.mxu0 %v1065
  %1341 = vmatpush.bf16.msra.mxu0 %v1062
  %1342 = vmatmul.bf16.gmra.mxu0 %v554
  %v1343 = vpop.f32.mrf.mxu0
  %v1344 = vadd.f32 %v1331, %v1343
  %v1345 = vpop.f32.mrf.mxu0
  %1346 = vdwg.mxu0
  %1347 = vmatpush.bf16.msra.mxu0 %v1107
  %1348 = vmatpush.bf16.msra.mxu0 %v1104
  %1349 = vmatpush.bf16.msra.mxu0 %v1101
  %1350 = vmatpush.bf16.msra.mxu0 %v1098
  %1351 = vmatpush.bf16.msra.mxu0 %v1095
  %1352 = vmatpush.bf16.msra.mxu0 %v1092
  %1353 = vmatpush.bf16.msra.mxu0 %v1089
  %1354 = vmatpush.bf16.msra.mxu0 %v1086
  %1355 = vmatmul.bf16.gmra.mxu0 %v555
  %v1356 = vpop.f32.mrf.mxu0
  %v1357 = vadd.f32 %v1344, %v1356
  %v1358 = vpop.f32.mrf.mxu0
  %1359 = vdwg.mxu0
  %v1360 = vmax.f32 %v1253, -1.0
  %v1361 = vmax.f32 %v1305, -1.0
  %v1362 = vmax.f32 %v1357, -1.0
  %v1363 = vmin.f32 %v1360, 1.0
  %v1364 = vmin.f32 %v1361, 1.0
  %v1365 = vmin.f32 %v1362, 1.0
  %v1366 = vmul.f32 %v1363, %v1363
  %v1367 = vmul.f32 %v1364, %v1364
  %v1368 = vmul.f32 %v1365, %v1365
  %v1369 = vld [vmem:[%s5] sm:$0x7]
  %vm1370 = vcmp.gt.f32.partialorder %v1369, 0.0
  %v1371 = vsel %vm1370, 1, 0
  %v1372 = vperm.slane %v1371, 0
  %v1373 = vperm.slane %v1371, 1
  %v1374 = vperm.slane %v1371, 2
  %vm1375 = vcmp.eq.s32.totalorder %v1372, 1
  %vm1376 = vcmp.eq.s32.totalorder %v1373, 1
  %vm1377 = vcmp.eq.s32.totalorder %v1374, 1
  %v1378 = vsel %vm1375, 1.0, %v1366
  %v1379 = vsel %vm1376, 1.0, %v1367
  %v1380 = vsel %vm1377, 1.0, %v1368
  %v1381 = vld [vmem:[%s6] sm:$0xf]
  %1383 = vst [vmem:[#allocation1] ss:$4 sm:$0xff] %v1381
  %v1384 = vld.sshfl [vmem:[#allocation1] sm:$0xff pattern:$0x73625140]
  %v1385 = vld.sshfl [vmem:[#allocation1 + $0x8] sm:$0xff pattern:$0x73625140]
  %v1388 = vpack.c.bf16 %v1384, %v1384
  %v1389 = vpack.c.bf16 %v1385, %v1385
  %v1390 = vld [vmem:[%s7] sm:$0xff]
  %v1391 = vld [vmem:[%s7 + $0x8] sm:$0xff]
  %v1392 = vld [vmem:[%s7 + $0x10] sm:$0xf]
  %v1393 = vld [vmem:[%s7 + $0x14] sm:$0xff]
  %v1394 = vld [vmem:[%s7 + $0x1c] sm:$0xff]
  %v1395 = vld [vmem:[%s7 + $0x24] sm:$0xf]
  %v1396 = vld [vmem:[%s7 + $0x28] sm:$0xff]
  %v1397 = vld [vmem:[%s7 + $0x30] sm:$0xff]
  %v1398 = vld [vmem:[%s7 + $0x38] sm:$0xf]
  %v1399 = vld [vmem:[%s7 + $0x3c] sm:$0xff]
  %v1400 = vld [vmem:[%s7 + $0x44] sm:$0xff]
  %v1401 = vld [vmem:[%s7 + $0x4c] sm:$0xf]
  %v1402 = vld [vmem:[%s7 + $0x50] sm:$0xff]
  %v1403 = vld [vmem:[%s7 + $0x58] sm:$0xff]
  %v1404 = vld [vmem:[%s7 + $0x60] sm:$0xf]
  %v1405 = vld [vmem:[%s7 + $0x64] sm:$0xff]
  %v1406 = vld [vmem:[%s7 + $0x6c] sm:$0xff]
  %v1407 = vld [vmem:[%s7 + $0x74] sm:$0xf]
  %v1408 = vld [vmem:[%s7 + $0x78] sm:$0xff]
  %v1409 = vld [vmem:[%s7 + $0x80] sm:$0xff]
  %v1410 = vld [vmem:[%s7 + $0x88] sm:$0xf]
  %v1411 = vld [vmem:[%s7 + $0x8c] sm:$0xff]
  %v1412 = vld [vmem:[%s7 + $0x94] sm:$0xff]
  %v1413 = vld [vmem:[%s7 + $0x9c] sm:$0xf]
  %v1414 = vld [vmem:[%s7 + $0xa0] sm:$0xff]
  %v1415 = vld [vmem:[%s7 + $0xa8] sm:$0xff]
  %v1416 = vld [vmem:[%s7 + $0xb0] sm:$0xf]
  %v1417 = vld [vmem:[%s7 + $0xb4] sm:$0xff]
  %v1418 = vld [vmem:[%s7 + $0xbc] sm:$0xff]
  %v1419 = vld [vmem:[%s7 + $0xc4] sm:$0xf]
  %v1420 = vld [vmem:[%s7 + $0xc8] sm:$0xff]
  %v1421 = vld [vmem:[%s7 + $0xd0] sm:$0xff]
  %v1422 = vld [vmem:[%s7 + $0xd8] sm:$0xf]
  %v1423 = vld [vmem:[%s7 + $0xdc] sm:$0xff]
  %v1424 = vld [vmem:[%s7 + $0xe4] sm:$0xff]
  %v1425 = vld [vmem:[%s7 + $0xec] sm:$0xf]
  %v1426 = vld [vmem:[%s7 + $0xf0] sm:$0xff]
  %v1427 = vld [vmem:[%s7 + $0xf8] sm:$0xff]
  %v1428 = vld [vmem:[%s7 + $0x100] sm:$0xf]
  %v1429 = vld [vmem:[%s7 + $0x104] sm:$0xff]
  %v1430 = vld [vmem:[%s7 + $0x10c] sm:$0xff]
  %v1431 = vld [vmem:[%s7 + $0x114] sm:$0xf]
  %v1432 = vld [vmem:[%s7 + $0x118] sm:$0xff]
  %v1433 = vld [vmem:[%s7 + $0x120] sm:$0xff]
  %v1434 = vld [vmem:[%s7 + $0x128] sm:$0xf]
  %v1435 = vld [vmem:[%s7 + $0x12c] sm:$0xff]
  %v1436 = vld [vmem:[%s7 + $0x134] sm:$0xff]
  %v1437 = vld [vmem:[%s7 + $0x13c] sm:$0xf]
  %v1438 = vld [vmem:[%s7 + $0x140] sm:$0xff]
  %v1439 = vld [vmem:[%s7 + $0x148] sm:$0xff]
  %v1440 = vld [vmem:[%s7 + $0x150] sm:$0xf]
  %v1441 = vld [vmem:[%s7 + $0x154] sm:$0xff]
  %v1442 = vld [vmem:[%s7 + $0x15c] sm:$0xff]
  %v1443 = vld [vmem:[%s7 + $0x164] sm:$0xf]
  %v1444 = vld [vmem:[%s7 + $0x168] sm:$0xff]
  %v1445 = vld [vmem:[%s7 + $0x170] sm:$0xff]
  %v1446 = vld [vmem:[%s7 + $0x178] sm:$0xf]
  %v1447 = vld [vmem:[%s7 + $0x17c] sm:$0xff]
  %v1448 = vld [vmem:[%s7 + $0x184] sm:$0xff]
  %v1449 = vld [vmem:[%s7 + $0x18c] sm:$0xf]
  %v1450 = vld [vmem:[%s7 + $0x190] sm:$0xff]
  %v1451 = vld [vmem:[%s7 + $0x198] sm:$0xff]
  %v1452 = vld [vmem:[%s7 + $0x1a0] sm:$0xf]
  %v1453 = vld [vmem:[%s7 + $0x1a4] sm:$0xff]
  %v1454 = vld [vmem:[%s7 + $0x1ac] sm:$0xff]
  %v1455 = vld [vmem:[%s7 + $0x1b4] sm:$0xf]
  %v1456 = vld [vmem:[%s7 + $0x1b8] sm:$0xff]
  %v1457 = vld [vmem:[%s7 + $0x1c0] sm:$0xff]
  %v1458 = vld [vmem:[%s7 + $0x1c8] sm:$0xf]
  %v1459 = vld [vmem:[%s7 + $0x1cc] sm:$0xff]
  %v1460 = vld [vmem:[%s7 + $0x1d4] sm:$0xff]
  %v1461 = vld [vmem:[%s7 + $0x1dc] sm:$0xf]
  %v1462 = vld [vmem:[%s7 + $0x1e0] sm:$0xff]
  %v1463 = vld [vmem:[%s7 + $0x1e8] sm:$0xff]
  %v1464 = vld [vmem:[%s7 + $0x1f0] sm:$0xf]
  %v1465 = vld [vmem:[%s7 + $0x1f4] sm:$0xff]
  %v1466 = vld [vmem:[%s7 + $0x1fc] sm:$0xff]
  %v1467 = vld [vmem:[%s7 + $0x204] sm:$0xf]
  %v1468 = vld [vmem:[%s7 + $0x208] sm:$0xff]
  %v1469 = vld [vmem:[%s7 + $0x210] sm:$0xff]
  %v1470 = vld [vmem:[%s7 + $0x218] sm:$0xf]
  %v1471 = vld [vmem:[%s7 + $0x21c] sm:$0xff]
  %v1472 = vld [vmem:[%s7 + $0x224] sm:$0xff]
  %v1473 = vld [vmem:[%s7 + $0x22c] sm:$0xf]
  %v1474 = vld [vmem:[%s7 + $0x230] sm:$0xff]
  %v1475 = vld [vmem:[%s7 + $0x238] sm:$0xff]
  %v1476 = vld [vmem:[%s7 + $0x240] sm:$0xf]
  %v1477 = vld [vmem:[%s7 + $0x244] sm:$0xff]
  %v1478 = vld [vmem:[%s7 + $0x24c] sm:$0xff]
  %v1479 = vld [vmem:[%s7 + $0x254] sm:$0xf]
  %v1480 = vld [vmem:[%s7 + $0x258] sm:$0xff]
  %v1481 = vld [vmem:[%s7 + $0x260] sm:$0xff]
  %v1482 = vld [vmem:[%s7 + $0x268] sm:$0xf]
  %v1483 = vld [vmem:[%s7 + $0x26c] sm:$0xff]
  %v1484 = vld [vmem:[%s7 + $0x274] sm:$0xff]
  %v1485 = vld [vmem:[%s7 + $0x27c] sm:$0xf]
  %v1582 = vunpack.c.l.b16 %v1390
  %v1583 = vunpack.c.h.b16 %v1390
  %v1584 = vunpack.c.l.b16 %v1391
  %v1585 = vunpack.c.h.b16 %v1391
  %v1586 = vunpack.c.l.b16 %v1392
  %v1587 = vunpack.c.l.b16 %v1393
  %v1588 = vunpack.c.h.b16 %v1393
  %v1589 = vunpack.c.l.b16 %v1394
  %v1590 = vunpack.c.h.b16 %v1394
  %v1591 = vunpack.c.l.b16 %v1395
  %v1592 = vunpack.c.l.b16 %v1396
  %v1593 = vunpack.c.h.b16 %v1396
  %v1594 = vunpack.c.l.b16 %v1397
  %v1595 = vunpack.c.h.b16 %v1397
  %v1596 = vunpack.c.l.b16 %v1398
  %v1597 = vunpack.c.l.b16 %v1399
  %v1598 = vunpack.c.h.b16 %v1399
  %v1599 = vunpack.c.l.b16 %v1400
  %v1600 = vunpack.c.h.b16 %v1400
  %v1601 = vunpack.c.l.b16 %v1401
  %v1602 = vunpack.c.l.b16 %v1402
  %v1603 = vunpack.c.h.b16 %v1402
  %v1604 = vunpack.c.l.b16 %v1403
  %v1605 = vunpack.c.h.b16 %v1403
  %v1606 = vunpack.c.l.b16 %v1404
  %v1607 = vunpack.c.l.b16 %v1405
  %v1608 = vunpack.c.h.b16 %v1405
  %v1609 = vunpack.c.l.b16 %v1406
  %v1610 = vunpack.c.h.b16 %v1406
  %v1611 = vunpack.c.l.b16 %v1407
  %v1612 = vunpack.c.l.b16 %v1408
  %v1613 = vunpack.c.h.b16 %v1408
  %v1614 = vunpack.c.l.b16 %v1409
  %v1615 = vunpack.c.h.b16 %v1409
  %v1616 = vunpack.c.l.b16 %v1410
  %v1617 = vunpack.c.l.b16 %v1411
  %v1618 = vunpack.c.h.b16 %v1411
  %v1619 = vunpack.c.l.b16 %v1412
  %v1620 = vunpack.c.h.b16 %v1412
  %v1621 = vunpack.c.l.b16 %v1413
  %v1622 = vunpack.c.l.b16 %v1414
  %v1623 = vunpack.c.h.b16 %v1414
  %v1624 = vunpack.c.l.b16 %v1415
  %v1625 = vunpack.c.h.b16 %v1415
  %v1626 = vunpack.c.l.b16 %v1416
  %v1627 = vunpack.c.l.b16 %v1417
  %v1628 = vunpack.c.h.b16 %v1417
  %v1629 = vunpack.c.l.b16 %v1418
  %v1630 = vunpack.c.h.b16 %v1418
  %v1631 = vunpack.c.l.b16 %v1419
  %v1632 = vunpack.c.l.b16 %v1420
  %v1633 = vunpack.c.h.b16 %v1420
  %v1634 = vunpack.c.l.b16 %v1421
  %v1635 = vunpack.c.h.b16 %v1421
  %v1636 = vunpack.c.l.b16 %v1422
  %v1637 = vunpack.c.l.b16 %v1423
  %v1638 = vunpack.c.h.b16 %v1423
  %v1639 = vunpack.c.l.b16 %v1424
  %v1640 = vunpack.c.h.b16 %v1424
  %v1641 = vunpack.c.l.b16 %v1425
  %v1642 = vunpack.c.l.b16 %v1426
  %v1643 = vunpack.c.h.b16 %v1426
  %v1644 = vunpack.c.l.b16 %v1427
  %v1645 = vunpack.c.h.b16 %v1427
  %v1646 = vunpack.c.l.b16 %v1428
  %v1647 = vunpack.c.l.b16 %v1429
  %v1648 = vunpack.c.h.b16 %v1429
  %v1649 = vunpack.c.l.b16 %v1430
  %v1650 = vunpack.c.h.b16 %v1430
  %v1651 = vunpack.c.l.b16 %v1431
  %v1652 = vunpack.c.l.b16 %v1432
  %v1653 = vunpack.c.h.b16 %v1432
  %v1654 = vunpack.c.l.b16 %v1433
  %v1655 = vunpack.c.h.b16 %v1433
  %v1656 = vunpack.c.l.b16 %v1434
  %v1657 = vunpack.c.l.b16 %v1435
  %v1658 = vunpack.c.h.b16 %v1435
  %v1659 = vunpack.c.l.b16 %v1436
  %v1660 = vunpack.c.h.b16 %v1436
  %v1661 = vunpack.c.l.b16 %v1437
  %v1662 = vunpack.c.l.b16 %v1438
  %v1663 = vunpack.c.h.b16 %v1438
  %v1664 = vunpack.c.l.b16 %v1439
  %v1665 = vunpack.c.h.b16 %v1439
  %v1666 = vunpack.c.l.b16 %v1440
  %v1667 = vunpack.c.l.b16 %v1441
  %v1668 = vunpack.c.h.b16 %v1441
  %v1669 = vunpack.c.l.b16 %v1442
  %v1670 = vunpack.c.h.b16 %v1442
  %v1671 = vunpack.c.l.b16 %v1443
  %v1672 = vunpack.c.l.b16 %v1444
  %v1673 = vunpack.c.h.b16 %v1444
  %v1674 = vunpack.c.l.b16 %v1445
  %v1675 = vunpack.c.h.b16 %v1445
  %v1676 = vunpack.c.l.b16 %v1446
  %v1677 = vunpack.c.l.b16 %v1447
  %v1678 = vunpack.c.h.b16 %v1447
  %v1679 = vunpack.c.l.b16 %v1448
  %v1680 = vunpack.c.h.b16 %v1448
  %v1681 = vunpack.c.l.b16 %v1449
  %v1682 = vunpack.c.l.b16 %v1450
  %v1683 = vunpack.c.h.b16 %v1450
  %v1684 = vunpack.c.l.b16 %v1451
  %v1685 = vunpack.c.h.b16 %v1451
  %v1686 = vunpack.c.l.b16 %v1452
  %v1687 = vunpack.c.l.b16 %v1453
  %v1688 = vunpack.c.h.b16 %v1453
  %v1689 = vunpack.c.l.b16 %v1454
  %v1690 = vunpack.c.h.b16 %v1454
  %v1691 = vunpack.c.l.b16 %v1455
  %v1692 = vunpack.c.l.b16 %v1456
  %v1693 = vunpack.c.h.b16 %v1456
  %v1694 = vunpack.c.l.b16 %v1457
  %v1695 = vunpack.c.h.b16 %v1457
  %v1696 = vunpack.c.l.b16 %v1458
  %v1697 = vunpack.c.l.b16 %v1459
  %v1698 = vunpack.c.h.b16 %v1459
  %v1699 = vunpack.c.l.b16 %v1460
  %v1700 = vunpack.c.h.b16 %v1460
  %v1701 = vunpack.c.l.b16 %v1461
  %v1702 = vunpack.c.l.b16 %v1462
  %v1703 = vunpack.c.h.b16 %v1462
  %v1704 = vunpack.c.l.b16 %v1463
  %v1705 = vunpack.c.h.b16 %v1463
  %v1706 = vunpack.c.l.b16 %v1464
  %v1707 = vunpack.c.l.b16 %v1465
  %v1708 = vunpack.c.h.b16 %v1465
  %v1709 = vunpack.c.l.b16 %v1466
  %v1710 = vunpack.c.h.b16 %v1466
  %v1711 = vunpack.c.l.b16 %v1467
  %v1712 = vunpack.c.l.b16 %v1468
  %v1713 = vunpack.c.h.b16 %v1468
  %v1714 = vunpack.c.l.b16 %v1469
  %v1715 = vunpack.c.h.b16 %v1469
  %v1716 = vunpack.c.l.b16 %v1470
  %v1717 = vunpack.c.l.b16 %v1471
  %v1718 = vunpack.c.h.b16 %v1471
  %v1719 = vunpack.c.l.b16 %v1472
  %v1720 = vunpack.c.h.b16 %v1472
  %v1721 = vunpack.c.l.b16 %v1473
  %v1722 = vunpack.c.l.b16 %v1474
  %v1723 = vunpack.c.h.b16 %v1474
  %v1724 = vunpack.c.l.b16 %v1475
  %v1725 = vunpack.c.h.b16 %v1475
  %v1726 = vunpack.c.l.b16 %v1476
  %v1727 = vunpack.c.l.b16 %v1477
  %v1728 = vunpack.c.h.b16 %v1477
  %v1729 = vunpack.c.l.b16 %v1478
  %v1730 = vunpack.c.h.b16 %v1478
  %v1731 = vunpack.c.l.b16 %v1479
  %v1732 = vunpack.c.l.b16 %v1480
  %v1733 = vunpack.c.h.b16 %v1480
  %v1734 = vunpack.c.l.b16 %v1481
  %v1735 = vunpack.c.h.b16 %v1481
  %v1736 = vunpack.c.l.b16 %v1482
  %v1737 = vunpack.c.l.b16 %v1483
  %v1738 = vunpack.c.h.b16 %v1483
  %v1739 = vunpack.c.l.b16 %v1484
  %v1740 = vunpack.c.h.b16 %v1484
  %v1741 = vunpack.c.l.b16 %v1485
  %v1742 = vpack.c.b16 %v1587, %v1582
  %v1743 = vpack.c.b16 %v1588, %v1583
  %v1744 = vpack.c.b16 %v1589, %v1584
  %v1745 = vpack.c.b16 %v1590, %v1585
  %v1746 = vpack.c.b16 %v1591, %v1586
  %v1747 = vpack.c.b16 %v1597, %v1592
  %v1748 = vpack.c.b16 %v1598, %v1593
  %v1749 = vpack.c.b16 %v1599, %v1594
  %v1750 = vpack.c.b16 %v1600, %v1595
  %v1751 = vpack.c.b16 %v1601, %v1596
  %v1752 = vpack.c.b16 %v1607, %v1602
  %v1753 = vpack.c.b16 %v1608, %v1603
  %v1754 = vpack.c.b16 %v1609, %v1604
  %v1755 = vpack.c.b16 %v1610, %v1605
  %v1756 = vpack.c.b16 %v1611, %v1606
  %v1757 = vpack.c.b16 %v1617, %v1612
  %v1758 = vpack.c.b16 %v1618, %v1613
  %v1759 = vpack.c.b16 %v1619, %v1614
  %v1760 = vpack.c.b16 %v1620, %v1615
  %v1761 = vpack.c.b16 %v1621, %v1616
  %v1762 = vpack.c.b16 %v1627, %v1622
  %v1763 = vpack.c.b16 %v1628, %v1623
  %v1764 = vpack.c.b16 %v1629, %v1624
  %v1765 = vpack.c.b16 %v1630, %v1625
  %v1766 = vpack.c.b16 %v1631, %v1626
  %v1767 = vpack.c.b16 %v1637, %v1632
  %v1768 = vpack.c.b16 %v1638, %v1633
  %v1769 = vpack.c.b16 %v1639, %v1634
  %v1770 = vpack.c.b16 %v1640, %v1635
  %v1771 = vpack.c.b16 %v1641, %v1636
  %v1772 = vpack.c.b16 %v1647, %v1642
  %v1773 = vpack.c.b16 %v1648, %v1643
  %v1774 = vpack.c.b16 %v1649, %v1644
  %v1775 = vpack.c.b16 %v1650, %v1645
  %v1776 = vpack.c.b16 %v1651, %v1646
  %v1777 = vpack.c.b16 %v1657, %v1652
  %v1778 = vpack.c.b16 %v1658, %v1653
  %v1779 = vpack.c.b16 %v1659, %v1654
  %v1780 = vpack.c.b16 %v1660, %v1655
  %v1781 = vpack.c.b16 %v1661, %v1656
  %v1782 = vpack.c.b16 %v1667, %v1662
  %v1783 = vpack.c.b16 %v1668, %v1663
  %v1784 = vpack.c.b16 %v1669, %v1664
  %v1785 = vpack.c.b16 %v1670, %v1665
  %v1786 = vpack.c.b16 %v1671, %v1666
  %v1787 = vpack.c.b16 %v1677, %v1672
  %v1788 = vpack.c.b16 %v1678, %v1673
  %v1789 = vpack.c.b16 %v1679, %v1674
  %v1790 = vpack.c.b16 %v1680, %v1675
  %v1791 = vpack.c.b16 %v1681, %v1676
  %v1792 = vpack.c.b16 %v1687, %v1682
  %v1793 = vpack.c.b16 %v1688, %v1683
  %v1794 = vpack.c.b16 %v1689, %v1684
  %v1795 = vpack.c.b16 %v1690, %v1685
  %v1796 = vpack.c.b16 %v1691, %v1686
  %v1797 = vpack.c.b16 %v1697, %v1692
  %v1798 = vpack.c.b16 %v1698, %v1693
  %v1799 = vpack.c.b16 %v1699, %v1694
  %v1800 = vpack.c.b16 %v1700, %v1695
  %v1801 = vpack.c.b16 %v1701, %v1696
  %v1802 = vpack.c.b16 %v1707, %v1702
  %v1803 = vpack.c.b16 %v1708, %v1703
  %v1804 = vpack.c.b16 %v1709, %v1704
  %v1805 = vpack.c.b16 %v1710, %v1705
  %v1806 = vpack.c.b16 %v1711, %v1706
  %v1807 = vpack.c.b16 %v1717, %v1712
  %v1808 = vpack.c.b16 %v1718, %v1713
  %v1809 = vpack.c.b16 %v1719, %v1714
  %v1810 = vpack.c.b16 %v1720, %v1715
  %v1811 = vpack.c.b16 %v1721, %v1716
  %v1812 = vpack.c.b16 %v1727, %v1722
  %v1813 = vpack.c.b16 %v1728, %v1723
  %v1814 = vpack.c.b16 %v1729, %v1724
  %v1815 = vpack.c.b16 %v1730, %v1725
  %v1816 = vpack.c.b16 %v1731, %v1726
  %v1817 = vpack.c.b16 %v1737, %v1732
  %v1818 = vpack.c.b16 %v1738, %v1733
  %v1819 = vpack.c.b16 %v1739, %v1734
  %v1820 = vpack.c.b16 %v1740, %v1735
  %v1821 = vpack.c.b16 %v1741, %v1736
  %1902 = vmatpush.bf16.msra.mxu0 %v1777
  %1903 = vmatpush.bf16.msra.mxu0 %v1772
  %1904 = vmatpush.bf16.msra.mxu0 %v1767
  %1905 = vmatpush.bf16.msra.mxu0 %v1762
  %1906 = vmatpush.bf16.msra.mxu0 %v1757
  %1907 = vmatpush.bf16.msra.mxu0 %v1752
  %1908 = vmatpush.bf16.msra.mxu0 %v1747
  %1909 = vmatpush.bf16.msra.mxu0 %v1742
  %1910 = vmatmul.bf16.gmra.mxu0 %v1388
  %v1911 = vpop.f32.mrf.mxu0
  %v1912 = vadd.f32 0.0, %v1911
  %v1913 = vpop.f32.mrf.mxu0
  %1914 = vdwg.mxu0
  %1915 = vmatpush.bf16.msra.mxu0 %v1817
  %1916 = vmatpush.bf16.msra.mxu0 %v1812
  %1917 = vmatpush.bf16.msra.mxu0 %v1807
  %1918 = vmatpush.bf16.msra.mxu0 %v1802
  %1919 = vmatpush.bf16.msra.mxu0 %v1797
  %1920 = vmatpush.bf16.msra.mxu0 %v1792
  %1921 = vmatpush.bf16.msra.mxu0 %v1787
  %1922 = vmatpush.bf16.msra.mxu0 %v1782
  %1923 = vmatmul.bf16.gmra.mxu0 %v1389
  %v1924 = vpop.f32.mrf.mxu0
  %v1925 = vadd.f32 %v1912, %v1924
  %v1926 = vpop.f32.mrf.mxu0
  %1927 = vdwg.mxu0
  %1928 = vmatpush.bf16.msra.mxu0 %v1778
  %1929 = vmatpush.bf16.msra.mxu0 %v1773
  %1930 = vmatpush.bf16.msra.mxu0 %v1768
  %1931 = vmatpush.bf16.msra.mxu0 %v1763
  %1932 = vmatpush.bf16.msra.mxu0 %v1758
  %1933 = vmatpush.bf16.msra.mxu0 %v1753
  %1934 = vmatpush.bf16.msra.mxu0 %v1748
  %1935 = vmatpush.bf16.msra.mxu0 %v1743
  %1936 = vmatmul.bf16.gmra.mxu0 %v1388
  %v1937 = vpop.f32.mrf.mxu0
  %v1938 = vadd.f32 0.0, %v1937
  %v1939 = vpop.f32.mrf.mxu0
  %1940 = vdwg.mxu0
  %1941 = vmatpush.bf16.msra.mxu0 %v1818
  %1942 = vmatpush.bf16.msra.mxu0 %v1813
  %1943 = vmatpush.bf16.msra.mxu0 %v1808
  %1944 = vmatpush.bf16.msra.mxu0 %v1803
  %1945 = vmatpush.bf16.msra.mxu0 %v1798
  %1946 = vmatpush.bf16.msra.mxu0 %v1793
  %1947 = vmatpush.bf16.msra.mxu0 %v1788
  %1948 = vmatpush.bf16.msra.mxu0 %v1783
  %1949 = vmatmul.bf16.gmra.mxu0 %v1389
  %v1950 = vpop.f32.mrf.mxu0
  %v1951 = vadd.f32 %v1938, %v1950
  %v1952 = vpop.f32.mrf.mxu0
  %1953 = vdwg.mxu0
  %1954 = vmatpush.bf16.msra.mxu0 %v1779
  %1955 = vmatpush.bf16.msra.mxu0 %v1774
  %1956 = vmatpush.bf16.msra.mxu0 %v1769
  %1957 = vmatpush.bf16.msra.mxu0 %v1764
  %1958 = vmatpush.bf16.msra.mxu0 %v1759
  %1959 = vmatpush.bf16.msra.mxu0 %v1754
  %1960 = vmatpush.bf16.msra.mxu0 %v1749
  %1961 = vmatpush.bf16.msra.mxu0 %v1744
  %1962 = vmatmul.bf16.gmra.mxu0 %v1388
  %v1963 = vpop.f32.mrf.mxu0
  %v1964 = vadd.f32 0.0, %v1963
  %v1965 = vpop.f32.mrf.mxu0
  %1966 = vdwg.mxu0
  %1967 = vmatpush.bf16.msra.mxu0 %v1819
  %1968 = vmatpush.bf16.msra.mxu0 %v1814
  %1969 = vmatpush.bf16.msra.mxu0 %v1809
  %1970 = vmatpush.bf16.msra.mxu0 %v1804
  %1971 = vmatpush.bf16.msra.mxu0 %v1799
  %1972 = vmatpush.bf16.msra.mxu0 %v1794
  %1973 = vmatpush.bf16.msra.mxu0 %v1789
  %1974 = vmatpush.bf16.msra.mxu0 %v1784
  %1975 = vmatmul.bf16.gmra.mxu0 %v1389
  %v1976 = vpop.f32.mrf.mxu0
  %v1977 = vadd.f32 %v1964, %v1976
  %v1978 = vpop.f32.mrf.mxu0
  %1979 = vdwg.mxu0
  %1980 = vmatpush.bf16.msra.mxu0 %v1780
  %1981 = vmatpush.bf16.msra.mxu0 %v1775
  %1982 = vmatpush.bf16.msra.mxu0 %v1770
  %1983 = vmatpush.bf16.msra.mxu0 %v1765
  %1984 = vmatpush.bf16.msra.mxu0 %v1760
  %1985 = vmatpush.bf16.msra.mxu0 %v1755
  %1986 = vmatpush.bf16.msra.mxu0 %v1750
  %1987 = vmatpush.bf16.msra.mxu0 %v1745
  %1988 = vmatmul.bf16.gmra.mxu0 %v1388
  %v1989 = vpop.f32.mrf.mxu0
  %v1990 = vadd.f32 0.0, %v1989
  %v1991 = vpop.f32.mrf.mxu0
  %1992 = vdwg.mxu0
  %1993 = vmatpush.bf16.msra.mxu0 %v1820
  %1994 = vmatpush.bf16.msra.mxu0 %v1815
  %1995 = vmatpush.bf16.msra.mxu0 %v1810
  %1996 = vmatpush.bf16.msra.mxu0 %v1805
  %1997 = vmatpush.bf16.msra.mxu0 %v1800
  %1998 = vmatpush.bf16.msra.mxu0 %v1795
  %1999 = vmatpush.bf16.msra.mxu0 %v1790
  %2000 = vmatpush.bf16.msra.mxu0 %v1785
  %2001 = vmatmul.bf16.gmra.mxu0 %v1389
  %v2002 = vpop.f32.mrf.mxu0
  %v2003 = vadd.f32 %v1990, %v2002
  %v2004 = vpop.f32.mrf.mxu0
  %2005 = vdwg.mxu0
  %2006 = vmatpush.bf16.msra.mxu0 %v1781
  %2007 = vmatpush.bf16.msra.mxu0 %v1776
  %2008 = vmatpush.bf16.msra.mxu0 %v1771
  %2009 = vmatpush.bf16.msra.mxu0 %v1766
  %2010 = vmatpush.bf16.msra.mxu0 %v1761
  %2011 = vmatpush.bf16.msra.mxu0 %v1756
  %2012 = vmatpush.bf16.msra.mxu0 %v1751
  %2013 = vmatpush.bf16.msra.mxu0 %v1746
  %2014 = vmatmul.bf16.gmra.mxu0 %v1388
  %v2015 = vpop.f32.mrf.mxu0
  %v2016 = vadd.f32 0.0, %v2015
  %v2017 = vpop.f32.mrf.mxu0
  %2018 = vdwg.mxu0
  %2019 = vmatpush.bf16.msra.mxu0 %v1821
  %2020 = vmatpush.bf16.msra.mxu0 %v1816
  %2021 = vmatpush.bf16.msra.mxu0 %v1811
  %2022 = vmatpush.bf16.msra.mxu0 %v1806
  %2023 = vmatpush.bf16.msra.mxu0 %v1801
  %2024 = vmatpush.bf16.msra.mxu0 %v1796
  %2025 = vmatpush.bf16.msra.mxu0 %v1791
  %2026 = vmatpush.bf16.msra.mxu0 %v1786
  %2027 = vmatmul.bf16.gmra.mxu0 %v1389
  %v2028 = vpop.f32.mrf.mxu0
  %v2029 = vadd.f32 %v2016, %v2028
  %v2030 = vpop.f32.mrf.mxu0
  %2031 = vdwg.mxu0
  %2035 = vrot.lane.b32.xlu0 %v1378, 16
  %v2036 = vpop.permute.xlu0 %2035
  %2037 = vrot.lane.b32.xlu0 %v1379, 16
  %v2038 = vpop.permute.xlu0 %2037
  %2039 = vrot.lane.b32.xlu0 %v1380, 16
  %v2040 = vpop.permute.xlu0 %2039
  %vm2041 = vcmask 130048
  %v2042 = vsel %vm2041, %v2036, %v2038
  %v2043 = vsel %vm2041, %v2038, %v2040
  %v2047 = vsel %vm2041, %v1380, %v2036
  %v2048 = vmul.f32 %v1925, %v1378
  %v2049 = vmul.f32 %v1951, %v1379
  %v2050 = vmul.f32 %v1977, %v2047
  %v2051 = vmul.f32 %v2003, %v2042
  %v2052 = vmul.f32 %v2029, %v2043
  %v2053 = vpack.c.bf16 %v2048, %v2048
  %v2054 = vpack.c.bf16 %v2049, %v2049
  %v2055 = vpack.c.bf16 %v2050, %v2050
  %v2056 = vpack.c.bf16 %v2051, %v2051
  %v2057 = vpack.c.bf16 %v2052, %v2052
  %v2058 = vld [vmem:[%s8] sm:$0xff]
  %v2059 = vld [vmem:[%s8 + $0x8] sm:$0xff]
  %v2060 = vld [vmem:[%s8 + $0x10] sm:$0xff]
  %v2061 = vld [vmem:[%s8 + $0x18] sm:$0xff]
  %v2062 = vld [vmem:[%s8 + $0x20] sm:$0xff]
  %v2063 = vld [vmem:[%s8 + $0x28] sm:$0xff]
  %v2064 = vld [vmem:[%s8 + $0x30] sm:$0xff]
  %v2065 = vld [vmem:[%s8 + $0x38] sm:$0xff]
  %v2066 = vld [vmem:[%s8 + $0x40] sm:$0xff]
  %v2067 = vld [vmem:[%s8 + $0x48] sm:$0xff]
  %v2068 = vld [vmem:[%s8 + $0x50] sm:$0xff]
  %v2069 = vld [vmem:[%s8 + $0x58] sm:$0xff]
  %v2070 = vld [vmem:[%s8 + $0x60] sm:$0xff]
  %v2071 = vld [vmem:[%s8 + $0x68] sm:$0xff]
  %v2072 = vld [vmem:[%s8 + $0x70] sm:$0xff]
  %v2073 = vld [vmem:[%s8 + $0x78] sm:$0xff]
  %v2074 = vld [vmem:[%s8 + $0x80] sm:$0xff]
  %v2075 = vld [vmem:[%s8 + $0x88] sm:$0xff]
  %v2076 = vld [vmem:[%s8 + $0x90] sm:$0xff]
  %v2077 = vld [vmem:[%s8 + $0x98] sm:$0xff]
  %v2078 = vld [vmem:[%s8 + $0xa0] sm:$0xff]
  %v2079 = vld [vmem:[%s8 + $0xa8] sm:$0xff]
  %v2080 = vld [vmem:[%s8 + $0xb0] sm:$0xff]
  %v2081 = vld [vmem:[%s8 + $0xb8] sm:$0xff]
  %v2082 = vld [vmem:[%s8 + $0xc0] sm:$0xff]
  %v2083 = vld [vmem:[%s8 + $0xc8] sm:$0xff]
  %v2084 = vld [vmem:[%s8 + $0xd0] sm:$0xff]
  %v2085 = vld [vmem:[%s8 + $0xd8] sm:$0xff]
  %v2086 = vld [vmem:[%s8 + $0xe0] sm:$0xff]
  %v2087 = vld [vmem:[%s8 + $0xe8] sm:$0xff]
  %v2088 = vld [vmem:[%s8 + $0xf0] sm:$0xff]
  %v2089 = vld [vmem:[%s8 + $0xf8] sm:$0xff]
  %v2090 = vld [vmem:[%s8 + $0x100] sm:$0xff]
  %v2091 = vld [vmem:[%s8 + $0x108] sm:$0xff]
  %v2092 = vld [vmem:[%s8 + $0x110] sm:$0xff]
  %v2093 = vld [vmem:[%s8 + $0x118] sm:$0xff]
  %v2094 = vld [vmem:[%s8 + $0x120] sm:$0xff]
  %v2095 = vld [vmem:[%s8 + $0x128] sm:$0xff]
  %v2096 = vld [vmem:[%s8 + $0x130] sm:$0xff]
  %v2097 = vld [vmem:[%s8 + $0x138] sm:$0xff]
  %v2098 = vld [vmem:[%s8 + $0x140] sm:$0xff]
  %v2099 = vld [vmem:[%s8 + $0x148] sm:$0xff]
  %v2100 = vld [vmem:[%s8 + $0x150] sm:$0xff]
  %v2101 = vld [vmem:[%s8 + $0x158] sm:$0xff]
  %v2102 = vld [vmem:[%s8 + $0x160] sm:$0xff]
  %v2103 = vld [vmem:[%s8 + $0x168] sm:$0xff]
  %v2104 = vld [vmem:[%s8 + $0x170] sm:$0xff]
  %v2105 = vld [vmem:[%s8 + $0x178] sm:$0xff]
  %v2106 = vld [vmem:[%s8 + $0x180] sm:$0xff]
  %v2107 = vld [vmem:[%s8 + $0x188] sm:$0xff]
  %v2108 = vld [vmem:[%s8 + $0x190] sm:$0xff]
  %v2109 = vld [vmem:[%s8 + $0x198] sm:$0xff]
  %v2110 = vld [vmem:[%s8 + $0x1a0] sm:$0xff]
  %v2111 = vld [vmem:[%s8 + $0x1a8] sm:$0xff]
  %v2112 = vld [vmem:[%s8 + $0x1b0] sm:$0xff]
  %v2113 = vld [vmem:[%s8 + $0x1b8] sm:$0xff]
  %v2114 = vld [vmem:[%s8 + $0x1c0] sm:$0xff]
  %v2115 = vld [vmem:[%s8 + $0x1c8] sm:$0xff]
  %v2116 = vld [vmem:[%s8 + $0x1d0] sm:$0xff]
  %v2117 = vld [vmem:[%s8 + $0x1d8] sm:$0xff]
  %v2118 = vld [vmem:[%s8 + $0x1e0] sm:$0xff]
  %v2119 = vld [vmem:[%s8 + $0x1e8] sm:$0xff]
  %v2120 = vld [vmem:[%s8 + $0x1f0] sm:$0xff]
  %v2121 = vld [vmem:[%s8 + $0x1f8] sm:$0xff]
  %v2122 = vld [vmem:[%s8 + $0x200] sm:$0xff]
  %v2123 = vld [vmem:[%s8 + $0x208] sm:$0xff]
  %v2124 = vld [vmem:[%s8 + $0x210] sm:$0xff]
  %v2125 = vld [vmem:[%s8 + $0x218] sm:$0xff]
  %v2194 = vunpack.c.l.b16 %v2058
  %v2195 = vunpack.c.h.b16 %v2058
  %v2196 = vunpack.c.l.b16 %v2059
  %v2197 = vunpack.c.h.b16 %v2059
  %v2198 = vunpack.c.l.b16 %v2060
  %v2199 = vunpack.c.h.b16 %v2060
  %v2200 = vunpack.c.l.b16 %v2061
  %v2201 = vunpack.c.h.b16 %v2061
  %v2202 = vunpack.c.l.b16 %v2062
  %v2203 = vunpack.c.h.b16 %v2062
  %v2204 = vunpack.c.l.b16 %v2063
  %v2205 = vunpack.c.h.b16 %v2063
  %v2206 = vunpack.c.l.b16 %v2064
  %v2207 = vunpack.c.h.b16 %v2064
  %v2208 = vunpack.c.l.b16 %v2065
  %v2209 = vunpack.c.h.b16 %v2065
  %v2210 = vunpack.c.l.b16 %v2066
  %v2211 = vunpack.c.h.b16 %v2066
  %v2212 = vunpack.c.l.b16 %v2067
  %v2213 = vunpack.c.h.b16 %v2067
  %v2214 = vunpack.c.l.b16 %v2068
  %v2215 = vunpack.c.h.b16 %v2068
  %v2216 = vunpack.c.l.b16 %v2069
  %v2217 = vunpack.c.h.b16 %v2069
  %v2218 = vunpack.c.l.b16 %v2070
  %v2219 = vunpack.c.h.b16 %v2070
  %v2220 = vunpack.c.l.b16 %v2071
  %v2221 = vunpack.c.h.b16 %v2071
  %v2222 = vunpack.c.l.b16 %v2072
  %v2223 = vunpack.c.h.b16 %v2072
  %v2224 = vunpack.c.l.b16 %v2073
  %v2225 = vunpack.c.h.b16 %v2073
  %v2226 = vunpack.c.l.b16 %v2074
  %v2227 = vunpack.c.h.b16 %v2074
  %v2228 = vunpack.c.l.b16 %v2075
  %v2229 = vunpack.c.h.b16 %v2075
  %v2230 = vunpack.c.l.b16 %v2076
  %v2231 = vunpack.c.h.b16 %v2076
  %v2232 = vunpack.c.l.b16 %v2077
  %v2233 = vunpack.c.h.b16 %v2077
  %v2234 = vunpack.c.l.b16 %v2078
  %v2235 = vunpack.c.h.b16 %v2078
  %v2236 = vunpack.c.l.b16 %v2079
  %v2237 = vunpack.c.h.b16 %v2079
  %v2238 = vunpack.c.l.b16 %v2080
  %v2239 = vunpack.c.h.b16 %v2080
  %v2240 = vunpack.c.l.b16 %v2081
  %v2241 = vunpack.c.h.b16 %v2081
  %v2242 = vunpack.c.l.b16 %v2082
  %v2243 = vunpack.c.h.b16 %v2082
  %v2244 = vunpack.c.l.b16 %v2083
  %v2245 = vunpack.c.h.b16 %v2083
  %v2246 = vunpack.c.l.b16 %v2084
  %v2247 = vunpack.c.h.b16 %v2084
  %v2248 = vunpack.c.l.b16 %v2085
  %v2249 = vunpack.c.h.b16 %v2085
  %v2250 = vunpack.c.l.b16 %v2086
  %v2251 = vunpack.c.h.b16 %v2086
  %v2252 = vunpack.c.l.b16 %v2087
  %v2253 = vunpack.c.h.b16 %v2087
  %v2254 = vunpack.c.l.b16 %v2088
  %v2255 = vunpack.c.h.b16 %v2088
  %v2256 = vunpack.c.l.b16 %v2089
  %v2257 = vunpack.c.h.b16 %v2089
  %v2258 = vunpack.c.l.b16 %v2090
  %v2259 = vunpack.c.h.b16 %v2090
  %v2260 = vunpack.c.l.b16 %v2091
  %v2261 = vunpack.c.h.b16 %v2091
  %v2262 = vunpack.c.l.b16 %v2092
  %v2263 = vunpack.c.h.b16 %v2092
  %v2264 = vunpack.c.l.b16 %v2093
  %v2265 = vunpack.c.h.b16 %v2093
  %v2266 = vunpack.c.l.b16 %v2094
  %v2267 = vunpack.c.h.b16 %v2094
  %v2268 = vunpack.c.l.b16 %v2095
  %v2269 = vunpack.c.h.b16 %v2095
  %v2270 = vunpack.c.l.b16 %v2096
  %v2271 = vunpack.c.h.b16 %v2096
  %v2272 = vunpack.c.l.b16 %v2097
  %v2273 = vunpack.c.h.b16 %v2097
  %v2274 = vunpack.c.l.b16 %v2098
  %v2275 = vunpack.c.h.b16 %v2098
  %v2276 = vunpack.c.l.b16 %v2099
  %v2277 = vunpack.c.h.b16 %v2099
  %v2278 = vunpack.c.l.b16 %v2100
  %v2279 = vunpack.c.h.b16 %v2100
  %v2280 = vunpack.c.l.b16 %v2101
  %v2281 = vunpack.c.h.b16 %v2101
  %v2282 = vunpack.c.l.b16 %v2102
  %v2283 = vunpack.c.h.b16 %v2102
  %v2284 = vunpack.c.l.b16 %v2103
  %v2285 = vunpack.c.h.b16 %v2103
  %v2286 = vunpack.c.l.b16 %v2104
  %v2287 = vunpack.c.h.b16 %v2104
  %v2288 = vunpack.c.l.b16 %v2105
  %v2289 = vunpack.c.h.b16 %v2105
  %v2290 = vunpack.c.l.b16 %v2106
  %v2291 = vunpack.c.h.b16 %v2106
  %v2292 = vunpack.c.l.b16 %v2107
  %v2293 = vunpack.c.h.b16 %v2107
  %v2294 = vunpack.c.l.b16 %v2108
  %v2295 = vunpack.c.h.b16 %v2108
  %v2296 = vunpack.c.l.b16 %v2109
  %v2297 = vunpack.c.h.b16 %v2109
  %v2298 = vunpack.c.l.b16 %v2110
  %v2299 = vunpack.c.h.b16 %v2110
  %v2300 = vunpack.c.l.b16 %v2111
  %v2301 = vunpack.c.h.b16 %v2111
  %v2302 = vunpack.c.l.b16 %v2112
  %v2303 = vunpack.c.h.b16 %v2112
  %v2304 = vunpack.c.l.b16 %v2113
  %v2305 = vunpack.c.h.b16 %v2113
  %v2306 = vunpack.c.l.b16 %v2114
  %v2307 = vunpack.c.h.b16 %v2114
  %v2308 = vunpack.c.l.b16 %v2115
  %v2309 = vunpack.c.h.b16 %v2115
  %v2310 = vunpack.c.l.b16 %v2116
  %v2311 = vunpack.c.h.b16 %v2116
  %v2312 = vunpack.c.l.b16 %v2117
  %v2313 = vunpack.c.h.b16 %v2117
  %v2314 = vunpack.c.l.b16 %v2118
  %v2315 = vunpack.c.h.b16 %v2118
  %v2316 = vunpack.c.l.b16 %v2119
  %v2317 = vunpack.c.h.b16 %v2119
  %v2318 = vunpack.c.l.b16 %v2120
  %v2319 = vunpack.c.h.b16 %v2120
  %v2320 = vunpack.c.l.b16 %v2121
  %v2321 = vunpack.c.h.b16 %v2121
  %v2322 = vunpack.c.l.b16 %v2122
  %v2323 = vunpack.c.h.b16 %v2122
  %v2324 = vunpack.c.l.b16 %v2123
  %v2325 = vunpack.c.h.b16 %v2123
  %v2326 = vunpack.c.l.b16 %v2124
  %v2327 = vunpack.c.h.b16 %v2124
  %v2328 = vunpack.c.l.b16 %v2125
  %v2329 = vunpack.c.h.b16 %v2125
  %v2330 = vpack.c.b16 %v2196, %v2194
  %v2331 = vpack.c.b16 %v2197, %v2195
  %v2332 = vpack.c.b16 %v2200, %v2198
  %v2333 = vpack.c.b16 %v2201, %v2199
  %v2334 = vpack.c.b16 %v2204, %v2202
  %v2335 = vpack.c.b16 %v2205, %v2203
  %v2336 = vpack.c.b16 %v2208, %v2206
  %v2337 = vpack.c.b16 %v2209, %v2207
  %v2338 = vpack.c.b16 %v2212, %v2210
  %v2339 = vpack.c.b16 %v2213, %v2211
  %v2340 = vpack.c.b16 %v2216, %v2214
  %v2341 = vpack.c.b16 %v2217, %v2215
  %v2342 = vpack.c.b16 %v2220, %v2218
  %v2343 = vpack.c.b16 %v2221, %v2219
  %v2344 = vpack.c.b16 %v2224, %v2222
  %v2345 = vpack.c.b16 %v2225, %v2223
  %v2346 = vpack.c.b16 %v2228, %v2226
  %v2347 = vpack.c.b16 %v2229, %v2227
  %v2348 = vpack.c.b16 %v2232, %v2230
  %v2349 = vpack.c.b16 %v2233, %v2231
  %v2350 = vpack.c.b16 %v2236, %v2234
  %v2351 = vpack.c.b16 %v2237, %v2235
  %v2352 = vpack.c.b16 %v2240, %v2238
  %v2353 = vpack.c.b16 %v2241, %v2239
  %v2354 = vpack.c.b16 %v2244, %v2242
  %v2355 = vpack.c.b16 %v2245, %v2243
  %v2356 = vpack.c.b16 %v2248, %v2246
  %v2357 = vpack.c.b16 %v2249, %v2247
  %v2358 = vpack.c.b16 %v2252, %v2250
  %v2359 = vpack.c.b16 %v2253, %v2251
  %v2360 = vpack.c.b16 %v2256, %v2254
  %v2361 = vpack.c.b16 %v2257, %v2255
  %v2362 = vpack.c.b16 %v2260, %v2258
  %v2363 = vpack.c.b16 %v2261, %v2259
  %v2364 = vpack.c.b16 %v2264, %v2262
  %v2365 = vpack.c.b16 %v2265, %v2263
  %v2366 = vpack.c.b16 %v2268, %v2266
  %v2367 = vpack.c.b16 %v2269, %v2267
  %v2368 = vpack.c.b16 %v2272, %v2270
  %v2369 = vpack.c.b16 %v2273, %v2271
  %v2370 = vpack.c.b16 %v2276, %v2274
  %v2371 = vpack.c.b16 %v2277, %v2275
  %v2372 = vpack.c.b16 %v2280, %v2278
  %v2373 = vpack.c.b16 %v2281, %v2279
  %v2374 = vpack.c.b16 %v2284, %v2282
  %v2375 = vpack.c.b16 %v2285, %v2283
  %v2376 = vpack.c.b16 %v2288, %v2286
  %v2377 = vpack.c.b16 %v2289, %v2287
  %v2378 = vpack.c.b16 %v2292, %v2290
  %v2379 = vpack.c.b16 %v2293, %v2291
  %v2380 = vpack.c.b16 %v2296, %v2294
  %v2381 = vpack.c.b16 %v2297, %v2295
  %v2382 = vpack.c.b16 %v2300, %v2298
  %v2383 = vpack.c.b16 %v2301, %v2299
  %v2384 = vpack.c.b16 %v2304, %v2302
  %v2385 = vpack.c.b16 %v2305, %v2303
  %v2386 = vpack.c.b16 %v2308, %v2306
  %v2387 = vpack.c.b16 %v2309, %v2307
  %v2388 = vpack.c.b16 %v2312, %v2310
  %v2389 = vpack.c.b16 %v2313, %v2311
  %v2390 = vpack.c.b16 %v2316, %v2314
  %v2391 = vpack.c.b16 %v2317, %v2315
  %v2392 = vpack.c.b16 %v2320, %v2318
  %v2393 = vpack.c.b16 %v2321, %v2319
  %v2394 = vpack.c.b16 %v2324, %v2322
  %v2395 = vpack.c.b16 %v2325, %v2323
  %v2396 = vpack.c.b16 %v2328, %v2326
  %v2397 = vpack.c.b16 %v2329, %v2327
  %vm2466 = vcmask 261120
  %v2468 = vsel %vm2466, %v2057, 0
  %2470 = vmatpush.bf16.msra.mxu0 %v2344
  %2471 = vmatpush.bf16.msra.mxu0 %v2342
  %2472 = vmatpush.bf16.msra.mxu0 %v2340
  %2473 = vmatpush.bf16.msra.mxu0 %v2338
  %2474 = vmatpush.bf16.msra.mxu0 %v2336
  %2475 = vmatpush.bf16.msra.mxu0 %v2334
  %2476 = vmatpush.bf16.msra.mxu0 %v2332
  %2477 = vmatpush.bf16.msra.mxu0 %v2330
  %2478 = vmatmul.bf16.gmra.mxu0 %v2053
  %v2479 = vpop.f32.mrf.mxu0
  %v2480 = vadd.f32 0.0, %v2479
  %v2481 = vpop.f32.mrf.mxu0
  %2482 = vdwg.mxu0
  %2483 = vmatpush.bf16.msra.mxu0 %v2360
  %2484 = vmatpush.bf16.msra.mxu0 %v2358
  %2485 = vmatpush.bf16.msra.mxu0 %v2356
  %2486 = vmatpush.bf16.msra.mxu0 %v2354
  %2487 = vmatpush.bf16.msra.mxu0 %v2352
  %2488 = vmatpush.bf16.msra.mxu0 %v2350
  %2489 = vmatpush.bf16.msra.mxu0 %v2348
  %2490 = vmatpush.bf16.msra.mxu0 %v2346
  %2491 = vmatmul.bf16.gmra.mxu0 %v2054
  %v2492 = vpop.f32.mrf.mxu0
  %v2493 = vadd.f32 %v2480, %v2492
  %v2494 = vpop.f32.mrf.mxu0
  %2495 = vdwg.mxu0
  %2496 = vmatpush.bf16.msra.mxu0 %v2376
  %2497 = vmatpush.bf16.msra.mxu0 %v2374
  %2498 = vmatpush.bf16.msra.mxu0 %v2372
  %2499 = vmatpush.bf16.msra.mxu0 %v2370
  %2500 = vmatpush.bf16.msra.mxu0 %v2368
  %2501 = vmatpush.bf16.msra.mxu0 %v2366
  %2502 = vmatpush.bf16.msra.mxu0 %v2364
  %2503 = vmatpush.bf16.msra.mxu0 %v2362
  %2504 = vmatmul.bf16.gmra.mxu0 %v2055
  %v2505 = vpop.f32.mrf.mxu0
  %v2506 = vadd.f32 %v2493, %v2505
  %v2507 = vpop.f32.mrf.mxu0
  %2508 = vdwg.mxu0
  %2509 = vmatpush.bf16.msra.mxu0 %v2392
  %2510 = vmatpush.bf16.msra.mxu0 %v2390
  %2511 = vmatpush.bf16.msra.mxu0 %v2388
  %2512 = vmatpush.bf16.msra.mxu0 %v2386
  %2513 = vmatpush.bf16.msra.mxu0 %v2384
  %2514 = vmatpush.bf16.msra.mxu0 %v2382
  %2515 = vmatpush.bf16.msra.mxu0 %v2380
  %2516 = vmatpush.bf16.msra.mxu0 %v2378
  %2517 = vmatmul.bf16.gmra.mxu0 %v2056
  %v2518 = vpop.f32.mrf.mxu0
  %v2519 = vadd.f32 %v2506, %v2518
  %v2520 = vpop.f32.mrf.mxu0
  %2521 = vdwg.mxu0
  %2522 = vmatpush.bf16.msra.mxu0 0
  %2523 = vmatpush.bf16.msra.mxu0 0
  %2524 = vmatpush.bf16.msra.mxu0 0
  %2525 = vmatpush.bf16.msra.mxu0 0
  %2526 = vmatpush.bf16.msra.mxu0 0
  %2527 = vmatpush.bf16.msra.mxu0 0
  %2528 = vmatpush.bf16.msra.mxu0 %v2396
  %2529 = vmatpush.bf16.msra.mxu0 %v2394
  %2530 = vmatmul.bf16.gmra.mxu0 %v2468
  %v2531 = vpop.f32.mrf.mxu0
  %v2532 = vadd.f32 %v2519, %v2531
  %v2533 = vpop.f32.mrf.mxu0
  %2534 = vdwg.mxu0
  %2535 = vmatpush.bf16.msra.mxu0 %v2345
  %2536 = vmatpush.bf16.msra.mxu0 %v2343
  %2537 = vmatpush.bf16.msra.mxu0 %v2341
  %2538 = vmatpush.bf16.msra.mxu0 %v2339
  %2539 = vmatpush.bf16.msra.mxu0 %v2337
  %2540 = vmatpush.bf16.msra.mxu0 %v2335
  %2541 = vmatpush.bf16.msra.mxu0 %v2333
  %2542 = vmatpush.bf16.msra.mxu0 %v2331
  %2543 = vmatmul.bf16.gmra.mxu0 %v2053
  %v2544 = vpop.f32.mrf.mxu0
  %v2545 = vadd.f32 0.0, %v2544
  %v2546 = vpop.f32.mrf.mxu0
  %2547 = vdwg.mxu0
  %2548 = vmatpush.bf16.msra.mxu0 %v2361
  %2549 = vmatpush.bf16.msra.mxu0 %v2359
  %2550 = vmatpush.bf16.msra.mxu0 %v2357
  %2551 = vmatpush.bf16.msra.mxu0 %v2355
  %2552 = vmatpush.bf16.msra.mxu0 %v2353
  %2553 = vmatpush.bf16.msra.mxu0 %v2351
  %2554 = vmatpush.bf16.msra.mxu0 %v2349
  %2555 = vmatpush.bf16.msra.mxu0 %v2347
  %2556 = vmatmul.bf16.gmra.mxu0 %v2054
  %v2557 = vpop.f32.mrf.mxu0
  %v2558 = vadd.f32 %v2545, %v2557
  %v2559 = vpop.f32.mrf.mxu0
  %2560 = vdwg.mxu0
  %2561 = vmatpush.bf16.msra.mxu0 %v2377
  %2562 = vmatpush.bf16.msra.mxu0 %v2375
  %2563 = vmatpush.bf16.msra.mxu0 %v2373
  %2564 = vmatpush.bf16.msra.mxu0 %v2371
  %2565 = vmatpush.bf16.msra.mxu0 %v2369
  %2566 = vmatpush.bf16.msra.mxu0 %v2367
  %2567 = vmatpush.bf16.msra.mxu0 %v2365
  %2568 = vmatpush.bf16.msra.mxu0 %v2363
  %2569 = vmatmul.bf16.gmra.mxu0 %v2055
  %v2570 = vpop.f32.mrf.mxu0
  %v2571 = vadd.f32 %v2558, %v2570
  %v2572 = vpop.f32.mrf.mxu0
  %2573 = vdwg.mxu0
  %2574 = vmatpush.bf16.msra.mxu0 %v2393
  %2575 = vmatpush.bf16.msra.mxu0 %v2391
  %2576 = vmatpush.bf16.msra.mxu0 %v2389
  %2577 = vmatpush.bf16.msra.mxu0 %v2387
  %2578 = vmatpush.bf16.msra.mxu0 %v2385
  %2579 = vmatpush.bf16.msra.mxu0 %v2383
  %2580 = vmatpush.bf16.msra.mxu0 %v2381
  %2581 = vmatpush.bf16.msra.mxu0 %v2379
  %2582 = vmatmul.bf16.gmra.mxu0 %v2056
  %v2583 = vpop.f32.mrf.mxu0
  %v2584 = vadd.f32 %v2571, %v2583
  %v2585 = vpop.f32.mrf.mxu0
  %2586 = vdwg.mxu0
  %2587 = vmatpush.bf16.msra.mxu0 0
  %2588 = vmatpush.bf16.msra.mxu0 0
  %2589 = vmatpush.bf16.msra.mxu0 0
  %2590 = vmatpush.bf16.msra.mxu0 0
  %2591 = vmatpush.bf16.msra.mxu0 0
  %2592 = vmatpush.bf16.msra.mxu0 0
  %2593 = vmatpush.bf16.msra.mxu0 %v2397
  %2594 = vmatpush.bf16.msra.mxu0 %v2395
  %2595 = vmatmul.bf16.gmra.mxu0 %v2468
  %v2596 = vpop.f32.mrf.mxu0
  %v2597 = vadd.f32 %v2584, %v2596
  %v2598 = vpop.f32.mrf.mxu0
  %2599 = vdwg.mxu0
  %v2602 = vrot.slane %v2597, 6
  %vm2603 = vcmask 1041408
  %v2604 = vsel %vm2603, %v2532, %v2602
  %2606 = vst [vmem:[%s9] sm:$0xf] %v2604
  // Predicated region
  $region38: #{noise_model_forward.1} parent=0 // pred_check
    _
  $region39: #{noise_model_forward.1} parent=0 // pred_check_branch
    %2608 = sbr.rel (0) target = $region41
  $region40: #{noise_model_forward.1} parent=0 // pred_region
    _
  $region41: #{noise_model_forward.1} parent=0 // pred_fallthru
    _
  // Predicated region
  $region42: #{noise_model_forward.1} parent=0 // pred_check
    _
  $region43: #{noise_model_forward.1} parent=0 // pred_check_branch
    %2610 = sbr.rel (0) target = $region45
  $region44: #{noise_model_forward.1} parent=0 // pred_region
    _
  $region45: #{noise_model_forward.1} parent=0 // pred_fallthru
    _

</llo_original>
